<compile_context>
chip_gen: v6e
topology: v6e:2x2x1
jax: 0.10.0
libtpu: 0.0.40
codegen_flags: <defaults>
</compile_context>

<pallas_src>
import functools

import jax
import jax.numpy as jnp
import numpy as np
from jax.experimental import pallas as pl
from jax.experimental.pallas import tpu as pltpu

BN_EPS = 1e-5


def _round_up(v, m):
    return (v + m - 1) // m * m


def _pad_to(a, shape):
    pads = [(0, s - d) for d, s in zip(a.shape, shape)]
    return jnp.pad(a, pads)


def _rgin_kernel(eps_ref,        # SMEM (R,)                per-relation GIN eps
                 x_ref,          # VMEM (Np, FinP)  bf16    node features
                 adj_ref,        # VMEM (TM, Np)    bf16    adjacency row tile of relation r
                 w1_ref,         # VMEM (FinP, FoutP)       mlp Linear-1 weight (rel r)
                 b1_ref,         # VMEM (1, FoutP)          mlp Linear-1 bias
                 gamma_ref,      # VMEM (1, FoutP)          BN weight
                 beta_ref,       # VMEM (1, FoutP)          BN bias
                 w2_ref,         # VMEM (FoutP, FoutP)      mlp Linear-2 weight
                 b2_ref,         # VMEM (1, FoutP)          mlp Linear-2 bias
                 wself_ref,      # VMEM (FinP, FoutP)       self-loop Linear weight
                 bself_ref,      # VMEM (1, FoutP)          self-loop Linear bias
                 out_ref,        # VMEM (Np, FoutP) f32     resident accumulator output
                 h1_ref,         # VMEM (Np, FoutP) f32     staged pre-BN activations
                 sum_ref,        # VMEM (1, FoutP)  f32     BN running sum
                 sq_ref,         # VMEM (1, FoutP)  f32     BN running sum of squares
                 *y_ref,         # optional VMEM (Np, FoutP) bf16  y = x @ W1_r
                 reorder, n_real, tm):
    r = pl.program_id(0)
    t = pl.program_id(1)
    num_t = pl.num_programs(1)

    # ---- one-time init: self-loop linear on the full (resident) node block ----
    @pl.when(jnp.logical_and(r == 0, t == 0))
    def _():
        out_ref[...] = (
            jnp.dot(x_ref[...].astype(jnp.float32), wself_ref[...],
                    preferred_element_type=jnp.float32)
            + bself_ref[...])

    # ---- per-relation init at the first row tile ----
    @pl.when(t == 0)
    def _():
        sum_ref[...] = jnp.zeros_like(sum_ref)
        sq_ref[...] = jnp.zeros_like(sq_ref)
        if reorder:
            # y_r = x @ W1_r computed once per relation; the O(N^2) aggregation
            # then runs at width FoutP (< FinP).
            y_ref[0][...] = jnp.dot(
                x_ref[...].astype(jnp.float32), w1_ref[...],
                preferred_element_type=jnp.float32).astype(jnp.bfloat16)

    eps = eps_ref[r]
    start = pl.multiple_of(t * tm, tm)

    src = y_ref[0] if reorder else x_ref                       # bf16 (Np, F)
    # scatter-add aggregation as a dense matmul on the row tile:
    # bf16 operands, f32 accumulation on the MXU.
    agg = jnp.dot(adj_ref[...], src[...],
                  preferred_element_type=jnp.float32)          # (TM, F) f32
    own = src[pl.ds(start, tm), :].astype(jnp.float32)         # (TM, F)
    pre = (1.0 + eps) * own + agg

    if reorder:
        h1 = pre + b1_ref[...]                                 # W1 already applied
    else:
        h1 = jnp.dot(pre, w1_ref[...],
                     preferred_element_type=jnp.float32) + b1_ref[...]

    # ---- fused single-pass BN statistics (sum + sum-of-squares), masked to
    # the real (unpadded) node rows so padding never pollutes the stats ----
    row_ids = jax.lax.broadcasted_iota(jnp.int32, (tm, 1), 0) + t * tm
    valid = row_ids < n_real
    h1m = jnp.where(valid, h1, 0.0)
    sum_ref[...] = sum_ref[...] + jnp.sum(h1m, axis=0, keepdims=True)
    sq_ref[...] = sq_ref[...] + jnp.sum(h1m * h1m, axis=0, keepdims=True)

    h1_ref[pl.ds(start, tm), :] = h1

    # ---- finalize this relation: BN -> ReLU -> Linear-2 -> accumulate ----
    @pl.when(t == num_t - 1)
    def _():
        inv_n = 1.0 / float(n_real)
        mean = sum_ref[...] * inv_n
        var = sq_ref[...] * inv_n - mean * mean      # biased (training-mode) var
        inv_std = jax.lax.rsqrt(var + BN_EPS)
        h1n = (h1_ref[...] - mean) * inv_std * gamma_ref[...] + beta_ref[...]
        h1n = jnp.maximum(h1n, 0.0)
        h2 = jnp.dot(h1n, w2_ref[...],
                     preferred_element_type=jnp.float32) + b2_ref[...]
        out_ref[...] = out_ref[...] + h2


def rgin_conv_pallas(x, adj, params, *, row_tile=None):
    """x: (N, Fin) f32, adj: (R, N, N) f32 dense per-relation adjacency."""
    n, fin = x.shape
    r = adj.shape[0]
    fout = params["wself"].shape[1]

    # Pad feature dims to multiples of 128 (lane-dense stores, full MXU tiles).
    fin_p = _round_up(fin, 128)
    fout_p = _round_up(fout, 128)

    # Row-tile size for the adjacency: multiple of 8 (sublanes), capped so that
    # the double-buffered bf16 adjacency tiles stay well inside VMEM.
    n8 = _round_up(n, 8)
    if row_tile is None:
        budget = 24 * 1024 * 1024                       # adj double-buffer budget
        rows = budget // (2 * 2 * max(n8, 128))
        tm = int(min(512, n8, max(8, (rows // 8) * 8)))
    else:
        tm = _round_up(min(row_tile, n8), 8)
    n_pad = _round_up(n, tm)
    num_tiles = n_pad // tm

    # Associativity reorder: run the O(N^2) matmul at width min(FinP, FoutP).
    reorder = fout_p < fin_p

    xp = _pad_to(x, (n_pad, fin_p)).astype(jnp.bfloat16)
    adjp = _pad_to(adj, (r, n_pad, n_pad)).astype(jnp.bfloat16)
    w1 = _pad_to(params["w1"], (r, fin_p, fout_p))
    b1 = _pad_to(params["b1"], (r, 1, fout_p))
    gamma = _pad_to(params["gamma"], (r, 1, fout_p))
    beta = _pad_to(params["beta"], (r, 1, fout_p))
    w2 = _pad_to(params["w2"], (r, fout_p, fout_p))
    b2 = _pad_to(params["b2"], (r, 1, fout_p))
    wself = _pad_to(params["wself"], (fin_p, fout_p))
    bself = _pad_to(params["bself"], (1, fout_p))

    scratch = [
        pltpu.VMEM((n_pad, fout_p), jnp.float32),   # staged h1 (pre-BN) activations
        pltpu.VMEM((1, fout_p), jnp.float32),       # BN sum
        pltpu.VMEM((1, fout_p), jnp.float32),       # BN sum of squares
    ]
    if reorder:
        scratch.append(pltpu.VMEM((n_pad, fout_p), jnp.bfloat16))  # y = x @ W1_r

    kernel = functools.partial(_rgin_kernel, reorder=reorder, n_real=n, tm=tm)

    out = pl.pallas_call(
        kernel,
        out_shape=jax.ShapeDtypeStruct((n_pad, fout_p), jnp.float32),
        grid=(r, num_tiles),                         # relation outer, row tile inner
        in_specs=[
            pl.BlockSpec(memory_space=pltpu.MemorySpace.SMEM),            # eps
            pl.BlockSpec((n_pad, fin_p), lambda i, t: (0, 0)),            # x (resident)
            pl.BlockSpec((None, tm, n_pad), lambda i, t: (i, t, 0)),      # adj row tile
            pl.BlockSpec((None, fin_p, fout_p), lambda i, t: (i, 0, 0)),  # w1
            pl.BlockSpec((None, 1, fout_p), lambda i, t: (i, 0, 0)),      # b1
            pl.BlockSpec((None, 1, fout_p), lambda i, t: (i, 0, 0)),      # gamma
            pl.BlockSpec((None, 1, fout_p), lambda i, t: (i, 0, 0)),      # beta
            pl.BlockSpec((None, fout_p, fout_p), lambda i, t: (i, 0, 0)), # w2
            pl.BlockSpec((None, 1, fout_p), lambda i, t: (i, 0, 0)),      # b2
            pl.BlockSpec((fin_p, fout_p), lambda i, t: (0, 0)),           # wself
            pl.BlockSpec((1, fout_p), lambda i, t: (0, 0)),               # bself
        ],
        out_specs=pl.BlockSpec((n_pad, fout_p), lambda i, t: (0, 0)),     # accumulator
        scratch_shapes=scratch,
        compiler_params=pltpu.CompilerParams(
            # Both axes are "arbitrary": the output is a resident accumulator
            # across relations and the BN/h1 scratch carries across row tiles.
            dimension_semantics=("arbitrary", "arbitrary"),
            vmem_limit_bytes=48 * 1024 * 1024),
    )(params["eps"], xp, adjp, w1, b1, gamma, beta, w2, b2, wself, bself)

    return out[:n, :fout]


def build_adjacency(edge_index, edge_type, edge_weight, num_nodes,
                    num_relations):
    """Glue: densify COO edges into per-relation adjacency (R, N, N)."""
    row, col = edge_index[0], edge_index[1]
    if edge_weight is None:
        edge_weight = jnp.ones_like(row, dtype=jnp.float32)
    adj = jnp.zeros((num_relations, num_nodes, num_nodes), jnp.float32)
    return adj.at[edge_type, row, col].add(edge_weight)


def init_params(key, in_features, out_features, num_relations):
    keys = jax.random.split(key, 6)
    scale = 0.1
    return {
        "eps": jnp.zeros((num_relations,), jnp.float32),
        "wself": scale * jax.random.normal(keys[0], (in_features, out_features), jnp.float32),
        "bself": scale * jax.random.normal(keys[1], (1, out_features), jnp.float32),
        "w1": scale * jax.random.normal(keys[2], (num_relations, in_features, out_features), jnp.float32),
        "b1": scale * jax.random.normal(keys[3], (num_relations, 1, out_features), jnp.float32),
        "gamma": jnp.ones((num_relations, 1, out_features), jnp.float32),
        "beta": jnp.zeros((num_relations, 1, out_features), jnp.float32),
        "w2": scale * jax.random.normal(keys[4], (num_relations, out_features, out_features), jnp.float32),
        "b2": scale * jax.random.normal(keys[5], (num_relations, 1, out_features), jnp.float32),
    }


def rgin_conv_reference(x, adj, params):
    """Pure-JAX f32 reference mirroring the PyTorch forward (training-mode BN)."""
    out = x @ params["wself"] + params["bself"]
    r = adj.shape[0]
    for i in range(r):
        agg = adj[i] @ x
        h = (1.0 + params["eps"][i]) * x + agg
        h1 = h @ params["w1"][i] + params["b1"][i]
        mean = h1.mean(axis=0, keepdims=True)
        var = ((h1 - mean) ** 2).mean(axis=0, keepdims=True)
        h1 = (h1 - mean) / jnp.sqrt(var + BN_EPS) * params["gamma"][i] + params["beta"][i]
        h1 = jnp.maximum(h1, 0.0)
        out = out + h1 @ params["w2"][i] + params["b2"][i]
    return out


def _run_case(seed, n, fin, fout, r, e, row_tile=None):
    key = jax.random.PRNGKey(seed)
    kx, ke_row, ke_col, ke_type, kp = jax.random.split(key, 5)

    x = jax.random.normal(kx, (n, fin), jnp.float32)
    row = jax.random.randint(ke_row, (e,), 0, n, jnp.int32)
    col = jax.random.randint(ke_col, (e,), 0, n, jnp.int32)
    edge_index = jnp.stack([row, col], axis=0)            # (2, E)
    edge_type = jax.random.randint(ke_type, (e,), 0, r, jnp.int32)

    params = init_params(kp, fin, fout, r)
    adj = build_adjacency(edge_index, edge_type, None, n, r)

    out = jax.block_until_ready(rgin_conv_pallas(x, adj, params, row_tile=row_tile))
    ref = jax.block_until_ready(rgin_conv_reference(x, adj, params))
    np.testing.assert_allclose(np.asarray(out), np.asarray(ref),
                               rtol=5e-2, atol=5e-2)


if __name__ == "__main__":
    # Case 1: Fin <= Fout path, single row tile (N=16, Fin=8, Fout=16, R=3).
    _run_case(seed=0, n=16, fin=8, fout=16, r=3, e=48)

    # Case 2: Fout < Fin (associativity reorder), multiple row tiles with row
    # padding/masking (N=45 -> padded 48, TM=16 -> 3 tiles).
    _run_case(seed=0, n=45, fin=200, fout=16, r=3, e=96, row_tile=16)

    print("KERNEL_OK")
</pallas_src>

<mosaic_0001>
module attributes {stable_mosaic.version = 11 : i64} {
  func.func @_rgin_kernel(%arg0: i32, %arg1: i32, %arg2: memref<3xf32, #tpu.memory_space<smem>>, %arg3: memref<16x128xbf16, #tpu.memory_space<vmem>>, %arg4: memref<1x16x16xbf16, #tpu.memory_space<vmem>>, %arg5: memref<1x128x128xf32, #tpu.memory_space<vmem>>, %arg6: memref<1x1x128xf32, #tpu.memory_space<vmem>>, %arg7: memref<1x1x128xf32, #tpu.memory_space<vmem>>, %arg8: memref<1x1x128xf32, #tpu.memory_space<vmem>>, %arg9: memref<1x128x128xf32, #tpu.memory_space<vmem>>, %arg10: memref<1x1x128xf32, #tpu.memory_space<vmem>>, %arg11: memref<128x128xf32, #tpu.memory_space<vmem>>, %arg12: memref<1x128xf32, #tpu.memory_space<vmem>>, %arg13: memref<16x128xf32, #tpu.memory_space<vmem>>, %arg14: memref<16x128xf32, #tpu.memory_space<vmem>>, %arg15: memref<1x128xf32, #tpu.memory_space<vmem>>, %arg16: memref<1x128xf32, #tpu.memory_space<vmem>>) attributes {dimension_semantics = [#tpu.dimension_semantics<arbitrary>, #tpu.dimension_semantics<arbitrary>], iteration_bounds = array<i64: 3, 1>, scalar_prefetch = 0 : i64, scratch_operands = 3 : i64, tpu.core_type = #tpu.core_type<tc>, window_params = [{transform_indices = @transform_0, window_bounds = array<i64: 3>}, {pipeline_mode = #tpu.pipeline_mode<synchronous>, transform_indices = @transform_1, window_bounds = array<i64: 16, 128>}, {transform_indices = @transform_2, window_bounds = array<i64: 1, 16, 16>}, {transform_indices = @transform_3, window_bounds = array<i64: 1, 128, 128>}, {transform_indices = @transform_4, window_bounds = array<i64: 1, 1, 128>}, {transform_indices = @transform_5, window_bounds = array<i64: 1, 1, 128>}, {transform_indices = @transform_6, window_bounds = array<i64: 1, 1, 128>}, {transform_indices = @transform_7, window_bounds = array<i64: 1, 128, 128>}, {transform_indices = @transform_8, window_bounds = array<i64: 1, 1, 128>}, {pipeline_mode = #tpu.pipeline_mode<synchronous>, transform_indices = @transform_9, window_bounds = array<i64: 128, 128>}, {pipeline_mode = #tpu.pipeline_mode<synchronous>, transform_indices = @transform_10, window_bounds = array<i64: 1, 128>}, {pipeline_mode = #tpu.pipeline_mode<synchronous>, transform_indices = @transform_11, window_bounds = array<i64: 16, 128>}]} {
    %c0_i32 = arith.constant 0 : i32
    %0 = arith.cmpi eq, %arg0, %c0_i32 : i32
    %c0_i32_0 = arith.constant 0 : i32
    %1 = arith.cmpi eq, %arg1, %c0_i32_0 : i32
    %2 = arith.andi %0, %1 : i1
    %3 = arith.extui %2 : i1 to i32
    %c0_i32_1 = arith.constant 0 : i32
    %4 = arith.cmpi ne, %3, %c0_i32_1 : i32
    scf.if %4 {
      %c0_33 = arith.constant 0 : index
      %c0_34 = arith.constant 0 : index
      %56 = vector.load %arg3[%c0_33, %c0_34] : memref<16x128xbf16, #tpu.memory_space<vmem>>, vector<16x128xbf16>
      %57 = arith.extf %56 : vector<16x128xbf16> to vector<16x128xf32>
      %c0_35 = arith.constant 0 : index
      %c0_36 = arith.constant 0 : index
      %58 = vector.load %arg11[%c0_35, %c0_36] : memref<128x128xf32, #tpu.memory_space<vmem>>, vector<128x128xf32>
      %cst_37 = arith.constant dense<0.000000e+00> : vector<16x128xf32>
      %59 = tpu.matmul %57, %58, %cst_37 {dimension_numbers = #tpu.dot_dimension_numbers<[1], [0], [0], [1], [0, 0, 1, 1], [], []>} : vector<16x128xf32>, vector<128x128xf32>, vector<16x128xf32> -> vector<16x128xf32>
      %c0_38 = arith.constant 0 : index
      %c0_39 = arith.constant 0 : index
      %60 = vector.load %arg12[%c0_38, %c0_39] : memref<1x128xf32, #tpu.memory_space<vmem>>, vector<1x128xf32>
      %61 = vector.broadcast %60 : vector<1x128xf32> to vector<16x128xf32>
      %62 = arith.addf %59, %61 : vector<16x128xf32>
      %c0_40 = arith.constant 0 : index
      %c0_41 = arith.constant 0 : index
      %63 = vector.load %arg13[%c0_40, %c0_41] : memref<16x128xf32, #tpu.memory_space<vmem>>, vector<16x128xf32>
      tpu.vector_store %arg13[%c0_40, %c0_41], %62 {strides = array<i32>} : memref<16x128xf32, #tpu.memory_space<vmem>>, vector<16x128xf32>,
    } else {
    }
    %c0_i32_2 = arith.constant 0 : i32
    %5 = arith.cmpi eq, %arg1, %c0_i32_2 : i32
    %6 = arith.extui %5 : i1 to i32
    %c0_i32_3 = arith.constant 0 : i32
    %7 = arith.cmpi ne, %6, %c0_i32_3 : i32
    scf.if %7 {
      %cst_33 = arith.constant 0.000000e+00 : f32
      %56 = vector.broadcast %cst_33 : f32 to vector<1x128xf32>
      %c0_34 = arith.constant 0 : index
      %c0_35 = arith.constant 0 : index
      %57 = vector.load %arg15[%c0_34, %c0_35] : memref<1x128xf32, #tpu.memory_space<vmem>>, vector<1x128xf32>
      tpu.vector_store %arg15[%c0_34, %c0_35], %56 {strides = array<i32>} : memref<1x128xf32, #tpu.memory_space<vmem>>, vector<1x128xf32>,
      %cst_36 = arith.constant 0.000000e+00 : f32
      %58 = vector.broadcast %cst_36 : f32 to vector<1x128xf32>
      %c0_37 = arith.constant 0 : index
      %c0_38 = arith.constant 0 : index
      %59 = vector.load %arg16[%c0_37, %c0_38] : memref<1x128xf32, #tpu.memory_space<vmem>>, vector<1x128xf32>
      tpu.vector_store %arg16[%c0_37, %c0_38], %58 {strides = array<i32>} : memref<1x128xf32, #tpu.memory_space<vmem>>, vector<1x128xf32>,
    } else {
    }
    %8 = arith.index_cast %arg0 : i32 to index
    %9 = memref.load %arg2[%8] : memref<3xf32, #tpu.memory_space<smem>>
    %c16_i32 = arith.constant 16 : i32
    %10 = arith.muli %arg1, %c16_i32 : i32
    %11 = tpu.assume_multiple %10, 16 : i32
    %c0 = arith.constant 0 : index
    %c0_4 = arith.constant 0 : index
    %c0_5 = arith.constant 0 : index
    %12 = vector.load %arg4[%c0, %c0_4, %c0_5] : memref<1x16x16xbf16, #tpu.memory_space<vmem>>, vector<1x16x16xbf16>
    %13 = vector.shape_cast %12 : vector<1x16x16xbf16> to vector<16x16xbf16>
    %c0_6 = arith.constant 0 : index
    %c0_7 = arith.constant 0 : index
    %14 = vector.load %arg3[%c0_6, %c0_7] : memref<16x128xbf16, #tpu.memory_space<vmem>>, vector<16x128xbf16>
    %cst = arith.constant dense<0.000000e+00> : vector<16x128xf32>
    %15 = tpu.matmul %13, %14, %cst {dimension_numbers = #tpu.dot_dimension_numbers<[1], [0], [0], [1], [0, 0, 1, 1], [], []>} : vector<16x16xbf16>, vector<16x128xbf16>, vector<16x128xf32> -> vector<16x128xf32>
    %16 = arith.index_cast %11 : i32 to index
    %c0_8 = arith.constant 0 : index
    %17 = vector.load %arg3[%16, %c0_8] : memref<16x128xbf16, #tpu.memory_space<vmem>>, vector<16x128xbf16>
    %18 = arith.extf %17 : vector<16x128xbf16> to vector<16x128xf32>
    %cst_9 = arith.constant 1.000000e+00 : f32
    %19 = arith.addf %cst_9, %9 : f32
    %20 = vector.broadcast %19 : f32 to vector<16x128xf32>
    %21 = arith.mulf %20, %18 : vector<16x128xf32>
    %22 = arith.addf %21, %15 : vector<16x128xf32>
    %c0_10 = arith.constant 0 : index
    %c0_11 = arith.constant 0 : index
    %c0_12 = arith.constant 0 : index
    %23 = vector.load %arg5[%c0_10, %c0_11, %c0_12] : memref<1x128x128xf32, #tpu.memory_space<vmem>>, vector<1x128x128xf32>
    %24 = vector.shape_cast %23 : vector<1x128x128xf32> to vector<128x128xf32>
    %cst_13 = arith.constant dense<0.000000e+00> : vector<16x128xf32>
    %25 = tpu.matmul %22, %24, %cst_13 {dimension_numbers = #tpu.dot_dimension_numbers<[1], [0], [0], [1], [0, 0, 1, 1], [], []>} : vector<16x128xf32>, vector<128x128xf32>, vector<16x128xf32> -> vector<16x128xf32>
    %c0_14 = arith.constant 0 : index
    %c0_15 = arith.constant 0 : index
    %c0_16 = arith.constant 0 : index
    %26 = vector.load %arg6[%c0_14, %c0_15, %c0_16] : memref<1x1x128xf32, #tpu.memory_space<vmem>>, vector<1x1x128xf32>
    %27 = vector.shape_cast %26 : vector<1x1x128xf32> to vector<1x128xf32>
    %28 = vector.broadcast %27 : vector<1x128xf32> to vector<16x128xf32>
    %29 = arith.addf %25, %28 : vector<16x128xf32>
    %30 = tpu.iota {dimensions = array<i32: 0>} : vector<16x1xi32>
    %c16_i32_17 = arith.constant 16 : i32
    %31 = arith.muli %arg1, %c16_i32_17 : i32
    %32 = vector.broadcast %31 : i32 to vector<16x1xi32>
    %33 = arith.addi %30, %32 : vector<16x1xi32>
    %c16_i32_18 = arith.constant 16 : i32
    %34 = vector.broadcast %c16_i32_18 : i32 to vector<16x1xi32>
    %35 = arith.cmpi slt, %33, %34 : vector<16x1xi32>
    %cst_19 = arith.constant 0.000000e+00 : f32
    %36 = vector.shape_cast %35 : vector<16x1xi1> to vector<16x1xi1>
    %37 = vector.broadcast %36 : vector<16x1xi1> to vector<16x128xi1>
    %38 = vector.broadcast %cst_19 : f32 to vector<16x128xf32>
    %39 = arith.select %37, %29, %38 : vector<16x128xi1>, vector<16x128xf32>
    %c0_20 = arith.constant 0 : index
    %c0_21 = arith.constant 0 : index
    %40 = vector.load %arg15[%c0_20, %c0_21] : memref<1x128xf32, #tpu.memory_space<vmem>>, vector<1x128xf32>
    %cst_22 = arith.constant dense<0.000000e+00> : vector<128xf32>
    %41 = vector.multi_reduction <add>, %39, %cst_22 [0] : vector<16x128xf32> to vector<128xf32>
    %42 = vector.shape_cast %41 : vector<128xf32> to vector<1x128xf32>
    %43 = arith.addf %40, %42 : vector<1x128xf32>
    %c0_23 = arith.constant 0 : index
    %c0_24 = arith.constant 0 : index
    %44 = vector.load %arg15[%c0_23, %c0_24] : memref<1x128xf32, #tpu.memory_space<vmem>>, vector<1x128xf32>
    tpu.vector_store %arg15[%c0_23, %c0_24], %43 {strides = array<i32>} : memref<1x128xf32, #tpu.memory_space<vmem>>, vector<1x128xf32>,
    %c0_25 = arith.constant 0 : index
    %c0_26 = arith.constant 0 : index
    %45 = vector.load %arg16[%c0_25, %c0_26] : memref<1x128xf32, #tpu.memory_space<vmem>>, vector<1x128xf32>
    %46 = arith.mulf %39, %39 : vector<16x128xf32>
    %cst_27 = arith.constant dense<0.000000e+00> : vector<128xf32>
    %47 = vector.multi_reduction <add>, %46, %cst_27 [0] : vector<16x128xf32> to vector<128xf32>
    %48 = vector.shape_cast %47 : vector<128xf32> to vector<1x128xf32>
    %49 = arith.addf %45, %48 : vector<1x128xf32>
    %c0_28 = arith.constant 0 : index
    %c0_29 = arith.constant 0 : index
    %50 = vector.load %arg16[%c0_28, %c0_29] : memref<1x128xf32, #tpu.memory_space<vmem>>, vector<1x128xf32>
    tpu.vector_store %arg16[%c0_28, %c0_29], %49 {strides = array<i32>} : memref<1x128xf32, #tpu.memory_space<vmem>>, vector<1x128xf32>,
    %51 = arith.index_cast %11 : i32 to index
    %c0_30 = arith.constant 0 : index
    %52 = vector.load %arg14[%51, %c0_30] : memref<16x128xf32, #tpu.memory_space<vmem>>, vector<16x128xf32>
    tpu.vector_store %arg14[%51, %c0_30], %29 {strides = array<i32>} : memref<16x128xf32, #tpu.memory_space<vmem>>, vector<16x128xf32>,
    %c0_i32_31 = arith.constant 0 : i32
    %53 = arith.cmpi eq, %arg1, %c0_i32_31 : i32
    %54 = arith.extui %53 : i1 to i32
    %c0_i32_32 = arith.constant 0 : i32
    %55 = arith.cmpi ne, %54, %c0_i32_32 : i32
    scf.if %55 {
      %c0_33 = arith.constant 0 : index
      %c0_34 = arith.constant 0 : index
      %56 = vector.load %arg15[%c0_33, %c0_34] : memref<1x128xf32, #tpu.memory_space<vmem>>, vector<1x128xf32>
      %cst_35 = arith.constant 6.250000e-02 : f32
      %57 = vector.broadcast %cst_35 : f32 to vector<1x128xf32>
      %58 = arith.mulf %56, %57 : vector<1x128xf32>
      %c0_36 = arith.constant 0 : index
      %c0_37 = arith.constant 0 : index
      %59 = vector.load %arg16[%c0_36, %c0_37] : memref<1x128xf32, #tpu.memory_space<vmem>>, vector<1x128xf32>
      %cst_38 = arith.constant 6.250000e-02 : f32
      %60 = vector.broadcast %cst_38 : f32 to vector<1x128xf32>
      %61 = arith.mulf %59, %60 : vector<1x128xf32>
      %62 = arith.mulf %58, %58 : vector<1x128xf32>
      %63 = arith.subf %61, %62 : vector<1x128xf32>
      %cst_39 = arith.constant 9.99999974E-6 : f32
      %64 = vector.broadcast %cst_39 : f32 to vector<1x128xf32>
      %65 = arith.addf %63, %64 : vector<1x128xf32>
      %66 = math.rsqrt %65 : vector<1x128xf32>
      %c0_40 = arith.constant 0 : index
      %c0_41 = arith.constant 0 : index
      %67 = vector.load %arg14[%c0_40, %c0_41] : memref<16x128xf32, #tpu.memory_space<vmem>>, vector<16x128xf32>
      %68 = vector.broadcast %58 : vector<1x128xf32> to vector<16x128xf32>
      %69 = arith.subf %67, %68 : vector<16x128xf32>
      %70 = vector.broadcast %66 : vector<1x128xf32> to vector<16x128xf32>
      %71 = arith.mulf %69, %70 : vector<16x128xf32>
      %c0_42 = arith.constant 0 : index
      %c0_43 = arith.constant 0 : index
      %c0_44 = arith.constant 0 : index
      %72 = vector.load %arg7[%c0_42, %c0_43, %c0_44] : memref<1x1x128xf32, #tpu.memory_space<vmem>>, vector<1x1x128xf32>
      %73 = vector.shape_cast %72 : vector<1x1x128xf32> to vector<1x128xf32>
      %74 = vector.broadcast %73 : vector<1x128xf32> to vector<16x128xf32>
      %75 = arith.mulf %71, %74 : vector<16x128xf32>
      %c0_45 = arith.constant 0 : index
      %c0_46 = arith.constant 0 : index
      %c0_47 = arith.constant 0 : index
      %76 = vector.load %arg8[%c0_45, %c0_46, %c0_47] : memref<1x1x128xf32, #tpu.memory_space<vmem>>, vector<1x1x128xf32>
      %77 = vector.shape_cast %76 : vector<1x1x128xf32> to vector<1x128xf32>
      %78 = vector.broadcast %77 : vector<1x128xf32> to vector<16x128xf32>
      %79 = arith.addf %75, %78 : vector<16x128xf32>
      %cst_48 = arith.constant 0.000000e+00 : f32
      %80 = vector.broadcast %cst_48 : f32 to vector<16x128xf32>
      %81 = arith.maximumf %79, %80 : vector<16x128xf32>
      %c0_49 = arith.constant 0 : index
      %c0_50 = arith.constant 0 : index
      %c0_51 = arith.constant 0 : index
      %82 = vector.load %arg9[%c0_49, %c0_50, %c0_51] : memref<1x128x128xf32, #tpu.memory_space<vmem>>, vector<1x128x128xf32>
      %83 = vector.shape_cast %82 : vector<1x128x128xf32> to vector<128x128xf32>
      %cst_52 = arith.constant dense<0.000000e+00> : vector<16x128xf32>
      %84 = tpu.matmul %81, %83, %cst_52 {dimension_numbers = #tpu.dot_dimension_numbers<[1], [0], [0], [1], [0, 0, 1, 1], [], []>} : vector<16x128xf32>, vector<128x128xf32>, vector<16x128xf32> -> vector<16x128xf32>
      %c0_53 = arith.constant 0 : index
      %c0_54 = arith.constant 0 : index
      %c0_55 = arith.constant 0 : index
      %85 = vector.load %arg10[%c0_53, %c0_54, %c0_55] : memref<1x1x128xf32, #tpu.memory_space<vmem>>, vector<1x1x128xf32>
      %86 = vector.shape_cast %85 : vector<1x1x128xf32> to vector<1x128xf32>
      %87 = vector.broadcast %86 : vector<1x128xf32> to vector<16x128xf32>
      %88 = arith.addf %84, %87 : vector<16x128xf32>
      %c0_56 = arith.constant 0 : index
      %c0_57 = arith.constant 0 : index
      %89 = vector.load %arg13[%c0_56, %c0_57] : memref<16x128xf32, #tpu.memory_space<vmem>>, vector<16x128xf32>
      %90 = arith.addf %89, %88 : vector<16x128xf32>
      %c0_58 = arith.constant 0 : index
      %c0_59 = arith.constant 0 : index
      %91 = vector.load %arg13[%c0_58, %c0_59] : memref<16x128xf32, #tpu.memory_space<vmem>>, vector<16x128xf32>
      tpu.vector_store %arg13[%c0_58, %c0_59], %90 {strides = array<i32>} : memref<16x128xf32, #tpu.memory_space<vmem>>, vector<16x128xf32>,
    } else {
    }
    return
  }
  func.func @transform_0(%arg0: i32, %arg1: i32) -> i32 {
    %c0_i32 = arith.constant 0 : i32
    %c0_i32_0 = arith.constant 0 : i32
    return %c0_i32 : i32
  }
  func.func @transform_1(%arg0: i32, %arg1: i32) -> (i32, i32) {
    %c0_i32 = arith.constant 0 : i32
    %c0_i32_0 = arith.constant 0 : i32
    %c0_i32_1 = arith.constant 0 : i32
    return %c0_i32, %c0_i32_0 : i32, i32
  }
  func.func @transform_2(%arg0: i32, %arg1: i32) -> (i32, i32, i32) {
    %c0_i32 = arith.constant 0 : i32
    %c0_i32_0 = arith.constant 0 : i32
    return %arg0, %arg1, %c0_i32 : i32, i32, i32
  }
  func.func @transform_3(%arg0: i32, %arg1: i32) -> (i32, i32, i32) {
    %c0_i32 = arith.constant 0 : i32
    %c0_i32_0 = arith.constant 0 : i32
    %c0_i32_1 = arith.constant 0 : i32
    return %arg0, %c0_i32, %c0_i32_0 : i32, i32, i32
  }
  func.func @transform_4(%arg0: i32, %arg1: i32) -> (i32, i32, i32) {
    %c0_i32 = arith.constant 0 : i32
    %c0_i32_0 = arith.constant 0 : i32
    %c0_i32_1 = arith.constant 0 : i32
    return %arg0, %c0_i32, %c0_i32_0 : i32, i32, i32
  }
  func.func @transform_5(%arg0: i32, %arg1: i32) -> (i32, i32, i32) {
    %c0_i32 = arith.constant 0 : i32
    %c0_i32_0 = arith.constant 0 : i32
    %c0_i32_1 = arith.constant 0 : i32
    return %arg0, %c0_i32, %c0_i32_0 : i32, i32, i32
  }
  func.func @transform_6(%arg0: i32, %arg1: i32) -> (i32, i32, i32) {
    %c0_i32 = arith.constant 0 : i32
    %c0_i32_0 = arith.constant 0 : i32
    %c0_i32_1 = arith.constant 0 : i32
    return %arg0, %c0_i32, %c0_i32_0 : i32, i32, i32
  }
  func.func @transform_7(%arg0: i32, %arg1: i32) -> (i32, i32, i32) {
    %c0_i32 = arith.constant 0 : i32
    %c0_i32_0 = arith.constant 0 : i32
    %c0_i32_1 = arith.constant 0 : i32
    return %arg0, %c0_i32, %c0_i32_0 : i32, i32, i32
  }
  func.func @transform_8(%arg0: i32, %arg1: i32) -> (i32, i32, i32) {
    %c0_i32 = arith.constant 0 : i32
    %c0_i32_0 = arith.constant 0 : i32
    %c0_i32_1 = arith.constant 0 : i32
    return %arg0, %c0_i32, %c0_i32_0 : i32, i32, i32
  }
  func.func @transform_9(%arg0: i32, %arg1: i32) -> (i32, i32) {
    %c0_i32 = arith.constant 0 : i32
    %c0_i32_0 = arith.constant 0 : i32
    %c0_i32_1 = arith.constant 0 : i32
    return %c0_i32, %c0_i32_0 : i32, i32
  }
  func.func @transform_10(%arg0: i32, %arg1: i32) -> (i32, i32) {
    %c0_i32 = arith.constant 0 : i32
    %c0_i32_0 = arith.constant 0 : i32
    %c0_i32_1 = arith.constant 0 : i32
    return %c0_i32, %c0_i32_0 : i32, i32
  }
  func.func @transform_11(%arg0: i32, %arg1: i32) -> (i32, i32) {
    %c0_i32 = arith.constant 0 : i32
    %c0_i32_0 = arith.constant 0 : i32
    %c0_i32_1 = arith.constant 0 : i32
    return %c0_i32, %c0_i32_0 : i32, i32
  }
}

</mosaic_0001>

<llo_original>
// kernel: tpu_custom_call.1
$region0: #{tpu_custom_call.1}
  #allocation0 [shape = 'u32[]', space=smem, size = 0x4, offset = 0x4, fixed_abs, tag = 'smem constant byte address 0x4 - core index']
  #allocation1 [shape = 'u32[144,128]{1,0:T(1,128)}', space=vmem, size = 0x12000, scoped, tag = 'internal scratch']
  #allocation2 [shape = 'f32[16,128]{1,0:T(8,128)}', space=vmem, size = 0x2000, scoped, tag = 'scratch operand']
  #allocation3 [shape = 'f32[1,128]{1,0:T(1,128)}', space=vmem, size = 0x200, scoped, tag = 'scratch operand']
  #allocation4 [shape = 'f32[1,128]{1,0:T(1,128)}', space=vmem, size = 0x200, scoped, tag = 'scratch operand']
  %s0 = inlined_call_operand.hbm [shape: f32[3], index: 0, kind: input, shape index: {}]
  %s1 = inlined_call_operand.hbm [shape: bf16[16,128], index: 1, kind: input, shape index: {}]
  %s2 = inlined_call_operand.hbm [shape: bf16[3,16,16], index: 2, kind: input, shape index: {}]
  %s3 = inlined_call_operand.hbm [shape: f32[3,128,128], index: 3, kind: input, shape index: {}]
  %s4 = inlined_call_operand.vmem [shape: f32[3,1,128], index: 4, kind: input, shape index: {}]
  %s5 = inlined_call_operand.vmem [shape: f32[3,1,128], index: 5, kind: input, shape index: {}]
  %s6 = inlined_call_operand.vmem [shape: f32[3,1,128], index: 6, kind: input, shape index: {}]
  %s7 = inlined_call_operand.hbm [shape: f32[3,128,128], index: 7, kind: input, shape index: {}]
  %s8 = inlined_call_operand.vmem [shape: f32[3,1,128], index: 8, kind: input, shape index: {}]
  %s9 = inlined_call_operand.hbm [shape: f32[128,128], index: 9, kind: input, shape index: {}]
  %s10 = inlined_call_operand.vmem [shape: f32[1,128], index: 10, kind: input, shape index: {}]
  %s11 = inlined_call_operand.hbm [shape: f32[16,128], index: 11, kind: output, shape index: {}]
  %s12 = sld [smem:[#allocation0]]
  $region113: #{tpu_custom_call.1} parent=0
    _
  %s14 = ssub.s32 1, %s12
  %s15 = scalar_select 0, %s14, %s12
  $region1: #{tpu_custom_call.1} parent=0
    #allocation5 [shape = 'u8[512]{0}', space=smem, size = 0x200, scoped, tag = 'input window, operand 0, single buffered']
    #allocation6 [shape = 's32[2]{0}', space=sflag, size = 0x8, scoped, tag = 'scoped memory for tpu_custom_call.1']
    #allocation7 [shape = 's32[2]{0}', space=sflag, size = 0x8, scoped, tag = 'scoped memory for tpu_custom_call.1']
    #allocation8 [shape = 's32[2]{0}', space=sflag, size = 0x8, scoped, tag = 'scoped memory for tpu_custom_call.1']
    #allocation9 [shape = 'u8[4096]{0}', space=vmem, size = 0x1000, scoped, tag = 'input window, operand 1, single buffered']
    #allocation10 [shape = 'u8[8192]{0}', space=vmem, size = 0x2000, scoped, tag = 'input window, operand 2']
    #allocation11 [shape = 's32[2]{0}', space=sflag, size = 0x8, scoped, tag = 'scoped memory for tpu_custom_call.1']
    #allocation12 [shape = 'u8[131072]{0}', space=vmem, size = 0x20000, scoped, tag = 'input window, operand 3']
    #allocation13 [shape = 'u8[131072]{0}', space=vmem, size = 0x20000, scoped, tag = 'input window, operand 7']
    #allocation14 [shape = 's32[2]{0}', space=sflag, size = 0x8, scoped, tag = 'scoped memory for tpu_custom_call.1']
    #allocation15 [shape = 'u8[65536]{0}', space=vmem, size = 0x10000, scoped, tag = 'input window, operand 9, single buffered']
    #allocation16 [shape = 'u8[8192]{0}', space=vmem, size = 0x2000, scoped, tag = 'output window, operand 0, single buffered']
    %16 = vsyncpa [#allocation8], 0
    %17 = vsyncpa [#allocation6], 0
    %18 = vsyncpa [#allocation11], 0
    %s19 = scalar_lea.sflag [#allocation11], 1
    %20 = vsyncpa %s19, 0
    %21 = vsyncpa [#allocation14], 0
    %s22 = scalar_lea.sflag [#allocation14], 1
    %23 = vsyncpa %s22, 0
    %24 = vsyncpa [#allocation7], 0
    loop: start=0, step=1, limit=5
    $region2: #{tpu_custom_call.1} parent=1 // loop_pre_header
      _
    $region3: #{tpu_custom_call.1} parent=1 // loop_header
      %s26 = sphi 0, %s30
      %p27 = scmp.ge.s32.totalorder %s26, 5
      %s33 = sphi 0, %s45
      %s34 = sphi 0, %s41
      %s35 = sphi 0, %s33
      %s36 = sphi 0, %s34
      %s37 = sphi 0, %s35
      %s38 = sphi 0, %s36
      %s46 = sphi 0, %s46
      %s48 = sphi 0, %s46
      %s49 = sphi 0, %s48
      %s63 = sphi 0, %s49
      %s67 = sphi 0, %s67
      %s69 = sphi 0, %s67
      %s70 = sphi 0, %s69
      %s84 = sphi 0, %s70
      %s92 = sphi 0, %s94
      %s95 = sphi 0, %s92
      %s96 = sphi 0, %s95
      %s112 = sphi 0, %s96
      %s118 = sphi 0, %s120
      %s121 = sphi 0, %s118
      %s122 = sphi 0, %s121
      %s138 = sphi 0, %s122
      %s144 = sphi 0, %s146
      %s147 = sphi 0, %s144
      %s148 = sphi 0, %s147
      %s164 = sphi 0, %s148
      %s170 = sphi 0, %s172
      %s173 = sphi 0, %s170
      %s174 = sphi 0, %s173
      %s190 = sphi 0, %s174
      %s196 = sphi 0, %s198
      %s199 = sphi 0, %s196
      %s200 = sphi 0, %s199
      %s216 = sphi 0, %s200
      %s222 = sphi 0, %s224
      %s225 = sphi 0, %s222
      %s226 = sphi 0, %s225
      %s242 = sphi 0, %s226
      %s248 = sphi 0, %s250
      %s251 = sphi 0, %s248
      %s252 = sphi 0, %s251
      %s268 = sphi 0, %s252
      %s272 = sphi 0, %s272
      %s274 = sphi 0, %s272
      %s275 = sphi 0, %s274
      %s289 = sphi 0, %s275
      %s293 = sphi 0, %s293
      %s295 = sphi 0, %s293
      %s296 = sphi 0, %s295
      %s310 = sphi 0, %s296
      %s314 = sphi 0, %s314
      %s316 = sphi 0, %s314
      %s317 = sphi 0, %s316
      %s331 = sphi 0, %s317
    $region4: #{tpu_custom_call.1} parent=1 // loop_header_branch
      %29 = sbr.rel (%p27) target = $region8
    $region5: #{tpu_custom_call.1} parent=1 // loop_body
      %s31 = ssub.s32 %s26, 1
      %s32 = ssub.s32 %s26, 2
      %s39 = sadd.s32 1, %s34
      %p40 = scmp.ge.s32.totalorder %s39, 1
      %s41 = scalar_select %p40, 0, %s39
      %s42 = sadd.s32 1, %s33
      %s43 = scalar_select %p40, %s42, %s33
      %p44 = scmp.ge.s32.totalorder %s43, 3
      %s45 = scalar_select %p44, 0, %s43
      %s47 = sadd.s32 %s46, 1
      %p50 = scmp.eq.s32.totalorder %s26, 2
      %p51 = scmp.ne.s32.totalorder %s46, %s48
      %p52 = scmp.eq.s32.totalorder %s26, 0
      %p53 = por %p51, %p52
      %p54 = scmp.ne.s32.totalorder %s46, %s48
      %p55 = scmp.eq.s32.totalorder %s31, 2
      %p56 = por %p54, %p55
      %p57 = scmp.ne.s32.totalorder %s48, %s49
      %p58 = scmp.eq.s32.totalorder %s31, 0
      %p59 = por %p57, %p58
      %p60 = scmp.ne.s32.totalorder %s48, %s49
      %p61 = scmp.eq.s32.totalorder %s32, 2
      %p62 = por %p60, %p61
      %p64 = scmp.ne.s32.totalorder %s49, %s63
      %p65 = scmp.eq.s32.totalorder %s32, 0
      %p66 = por %p64, %p65
      %s68 = sadd.s32 %s67, 1
      %p71 = scmp.eq.s32.totalorder %s26, 2
      %p72 = scmp.ne.s32.totalorder %s67, %s69
      %p73 = scmp.eq.s32.totalorder %s26, 0
      %p74 = por %p72, %p73
      %p75 = scmp.ne.s32.totalorder %s67, %s69
      %p76 = scmp.eq.s32.totalorder %s31, 2
      %p77 = por %p75, %p76
      %p78 = scmp.ne.s32.totalorder %s69, %s70
      %p79 = scmp.eq.s32.totalorder %s31, 0
      %p80 = por %p78, %p79
      %p81 = scmp.ne.s32.totalorder %s69, %s70
      %p82 = scmp.eq.s32.totalorder %s32, 2
      %p83 = por %p81, %p82
      %p85 = scmp.ne.s32.totalorder %s70, %s84
      %p86 = scmp.eq.s32.totalorder %s32, 0
      %p87 = por %p85, %p86
      %s88 = ssub.s32 %s33, %s45
      %s89 = ssub.s32 %s34, %s41
      %s90 = sor.u32 %s88, %s89
      %p91 = scmp.eq.s32.totalorder %s90, 0
      %s93 = sadd.s32 %s92, 1
      %s94 = scalar_select %p91, %s92, %s93
      %p97 = pneg %p91
      %p98 = scmp.eq.s32.totalorder %s26, 2
      %p99 = por %p97, %p98
      %p100 = scmp.ne.s32.totalorder %s92, %s95
      %p101 = scmp.eq.s32.totalorder %s26, 0
      %p102 = por %p100, %p101
      %p103 = scmp.ne.s32.totalorder %s92, %s95
      %p104 = scmp.eq.s32.totalorder %s31, 2
      %p105 = por %p103, %p104
      %p106 = scmp.ne.s32.totalorder %s95, %s96
      %p107 = scmp.eq.s32.totalorder %s31, 0
      %p108 = por %p106, %p107
      %p109 = scmp.ne.s32.totalorder %s95, %s96
      %p110 = scmp.eq.s32.totalorder %s32, 2
      %p111 = por %p109, %p110
      %p113 = scmp.ne.s32.totalorder %s96, %s112
      %p114 = scmp.eq.s32.totalorder %s32, 0
      %p115 = por %p113, %p114
      %s116 = ssub.s32 %s33, %s45
      %p117 = scmp.eq.s32.totalorder %s116, 0
      %s119 = sadd.s32 %s118, 1
      %s120 = scalar_select %p117, %s118, %s119
      %p123 = pneg %p117
      %p124 = scmp.eq.s32.totalorder %s26, 2
      %p125 = por %p123, %p124
      %p126 = scmp.ne.s32.totalorder %s118, %s121
      %p127 = scmp.eq.s32.totalorder %s26, 0
      %p128 = por %p126, %p127
      %p129 = scmp.ne.s32.totalorder %s118, %s121
      %p130 = scmp.eq.s32.totalorder %s31, 2
      %p131 = por %p129, %p130
      %p132 = scmp.ne.s32.totalorder %s121, %s122
      %p133 = scmp.eq.s32.totalorder %s31, 0
      %p134 = por %p132, %p133
      %p135 = scmp.ne.s32.totalorder %s121, %s122
      %p136 = scmp.eq.s32.totalorder %s32, 2
      %p137 = por %p135, %p136
      %p139 = scmp.ne.s32.totalorder %s122, %s138
      %p140 = scmp.eq.s32.totalorder %s32, 0
      %p141 = por %p139, %p140
      %s142 = ssub.s32 %s33, %s45
      %p143 = scmp.eq.s32.totalorder %s142, 0
      %s145 = sadd.s32 %s144, 1
      %s146 = scalar_select %p143, %s144, %s145
      %p149 = pneg %p143
      %p150 = scmp.eq.s32.totalorder %s26, 2
      %p151 = por %p149, %p150
      %p152 = scmp.ne.s32.totalorder %s144, %s147
      %p153 = scmp.eq.s32.totalorder %s26, 0
      %p154 = por %p152, %p153
      %p155 = scmp.ne.s32.totalorder %s144, %s147
      %p156 = scmp.eq.s32.totalorder %s31, 2
      %p157 = por %p155, %p156
      %p158 = scmp.ne.s32.totalorder %s147, %s148
      %p159 = scmp.eq.s32.totalorder %s31, 0
      %p160 = por %p158, %p159
      %p161 = scmp.ne.s32.totalorder %s147, %s148
      %p162 = scmp.eq.s32.totalorder %s32, 2
      %p163 = por %p161, %p162
      %p165 = scmp.ne.s32.totalorder %s148, %s164
      %p166 = scmp.eq.s32.totalorder %s32, 0
      %p167 = por %p165, %p166
      %s168 = ssub.s32 %s33, %s45
      %p169 = scmp.eq.s32.totalorder %s168, 0
      %s171 = sadd.s32 %s170, 1
      %s172 = scalar_select %p169, %s170, %s171
      %p175 = pneg %p169
      %p176 = scmp.eq.s32.totalorder %s26, 2
      %p177 = por %p175, %p176
      %p178 = scmp.ne.s32.totalorder %s170, %s173
      %p179 = scmp.eq.s32.totalorder %s26, 0
      %p180 = por %p178, %p179
      %p181 = scmp.ne.s32.totalorder %s170, %s173
      %p182 = scmp.eq.s32.totalorder %s31, 2
      %p183 = por %p181, %p182
      %p184 = scmp.ne.s32.totalorder %s173, %s174
      %p185 = scmp.eq.s32.totalorder %s31, 0
      %p186 = por %p184, %p185
      %p187 = scmp.ne.s32.totalorder %s173, %s174
      %p188 = scmp.eq.s32.totalorder %s32, 2
      %p189 = por %p187, %p188
      %p191 = scmp.ne.s32.totalorder %s174, %s190
      %p192 = scmp.eq.s32.totalorder %s32, 0
      %p193 = por %p191, %p192
      %s194 = ssub.s32 %s33, %s45
      %p195 = scmp.eq.s32.totalorder %s194, 0
      %s197 = sadd.s32 %s196, 1
      %s198 = scalar_select %p195, %s196, %s197
      %p201 = pneg %p195
      %p202 = scmp.eq.s32.totalorder %s26, 2
      %p203 = por %p201, %p202
      %p204 = scmp.ne.s32.totalorder %s196, %s199
      %p205 = scmp.eq.s32.totalorder %s26, 0
      %p206 = por %p204, %p205
      %p207 = scmp.ne.s32.totalorder %s196, %s199
      %p208 = scmp.eq.s32.totalorder %s31, 2
      %p209 = por %p207, %p208
      %p210 = scmp.ne.s32.totalorder %s199, %s200
      %p211 = scmp.eq.s32.totalorder %s31, 0
      %p212 = por %p210, %p211
      %p213 = scmp.ne.s32.totalorder %s199, %s200
      %p214 = scmp.eq.s32.totalorder %s32, 2
      %p215 = por %p213, %p214
      %p217 = scmp.ne.s32.totalorder %s200, %s216
      %p218 = scmp.eq.s32.totalorder %s32, 0
      %p219 = por %p217, %p218
      %s220 = ssub.s32 %s33, %s45
      %p221 = scmp.eq.s32.totalorder %s220, 0
      %s223 = sadd.s32 %s222, 1
      %s224 = scalar_select %p221, %s222, %s223
      %p227 = pneg %p221
      %p228 = scmp.eq.s32.totalorder %s26, 2
      %p229 = por %p227, %p228
      %p230 = scmp.ne.s32.totalorder %s222, %s225
      %p231 = scmp.eq.s32.totalorder %s26, 0
      %p232 = por %p230, %p231
      %p233 = scmp.ne.s32.totalorder %s222, %s225
      %p234 = scmp.eq.s32.totalorder %s31, 2
      %p235 = por %p233, %p234
      %p236 = scmp.ne.s32.totalorder %s225, %s226
      %p237 = scmp.eq.s32.totalorder %s31, 0
      %p238 = por %p236, %p237
      %p239 = scmp.ne.s32.totalorder %s225, %s226
      %p240 = scmp.eq.s32.totalorder %s32, 2
      %p241 = por %p239, %p240
      %p243 = scmp.ne.s32.totalorder %s226, %s242
      %p244 = scmp.eq.s32.totalorder %s32, 0
      %p245 = por %p243, %p244
      %s246 = ssub.s32 %s33, %s45
      %p247 = scmp.eq.s32.totalorder %s246, 0
      %s249 = sadd.s32 %s248, 1
      %s250 = scalar_select %p247, %s248, %s249
      %p253 = pneg %p247
      %p254 = scmp.eq.s32.totalorder %s26, 2
      %p255 = por %p253, %p254
      %p256 = scmp.ne.s32.totalorder %s248, %s251
      %p257 = scmp.eq.s32.totalorder %s26, 0
      %p258 = por %p256, %p257
      %p259 = scmp.ne.s32.totalorder %s248, %s251
      %p260 = scmp.eq.s32.totalorder %s31, 2
      %p261 = por %p259, %p260
      %p262 = scmp.ne.s32.totalorder %s251, %s252
      %p263 = scmp.eq.s32.totalorder %s31, 0
      %p264 = por %p262, %p263
      %p265 = scmp.ne.s32.totalorder %s251, %s252
      %p266 = scmp.eq.s32.totalorder %s32, 2
      %p267 = por %p265, %p266
      %p269 = scmp.ne.s32.totalorder %s252, %s268
      %p270 = scmp.eq.s32.totalorder %s32, 0
      %p271 = por %p269, %p270
      %s273 = sadd.s32 %s272, 1
      %p276 = scmp.eq.s32.totalorder %s26, 2
      %p277 = scmp.ne.s32.totalorder %s272, %s274
      %p278 = scmp.eq.s32.totalorder %s26, 0
      %p279 = por %p277, %p278
      %p280 = scmp.ne.s32.totalorder %s272, %s274
      %p281 = scmp.eq.s32.totalorder %s31, 2
      %p282 = por %p280, %p281
      %p283 = scmp.ne.s32.totalorder %s274, %s275
      %p284 = scmp.eq.s32.totalorder %s31, 0
      %p285 = por %p283, %p284
      %p286 = scmp.ne.s32.totalorder %s274, %s275
      %p287 = scmp.eq.s32.totalorder %s32, 2
      %p288 = por %p286, %p287
      %p290 = scmp.ne.s32.totalorder %s275, %s289
      %p291 = scmp.eq.s32.totalorder %s32, 0
      %p292 = por %p290, %p291
      %s294 = sadd.s32 %s293, 1
      %p297 = scmp.eq.s32.totalorder %s26, 2
      %p298 = scmp.ne.s32.totalorder %s293, %s295
      %p299 = scmp.eq.s32.totalorder %s26, 0
      %p300 = por %p298, %p299
      %p301 = scmp.ne.s32.totalorder %s293, %s295
      %p302 = scmp.eq.s32.totalorder %s31, 2
      %p303 = por %p301, %p302
      %p304 = scmp.ne.s32.totalorder %s295, %s296
      %p305 = scmp.eq.s32.totalorder %s31, 0
      %p306 = por %p304, %p305
      %p307 = scmp.ne.s32.totalorder %s295, %s296
      %p308 = scmp.eq.s32.totalorder %s32, 2
      %p309 = por %p307, %p308
      %p311 = scmp.ne.s32.totalorder %s296, %s310
      %p312 = scmp.eq.s32.totalorder %s32, 0
      %p313 = por %p311, %p312
      %s315 = sadd.s32 %s314, 1
      %p318 = scmp.eq.s32.totalorder %s26, 2
      %p319 = scmp.ne.s32.totalorder %s314, %s316
      %p320 = scmp.eq.s32.totalorder %s26, 0
      %p321 = por %p319, %p320
      %p322 = scmp.ne.s32.totalorder %s314, %s316
      %p323 = scmp.eq.s32.totalorder %s31, 2
      %p324 = por %p322, %p323
      %p325 = scmp.ne.s32.totalorder %s316, %s317
      %p326 = scmp.eq.s32.totalorder %s31, 0
      %p327 = por %p325, %p326
      %p328 = scmp.ne.s32.totalorder %s316, %s317
      %p329 = scmp.eq.s32.totalorder %s32, 2
      %p330 = por %p328, %p329
      %p332 = scmp.ne.s32.totalorder %s317, %s331
      %p333 = scmp.eq.s32.totalorder %s32, 0
      %p334 = por %p332, %p333
      %p335 = scmp.le.s32.totalorder 1, %s26
      %p336 = scmp.lt.s32.totalorder %s26, 4
      %p337 = pnand %p335, %p336
      %p338 = pneg %p337
      // Predicated region
      $region9: #{tpu_custom_call.1} parent=5 // pred_check
        _
      $region10: #{tpu_custom_call.1} parent=5 // pred_check_branch
        %340 = sbr.rel (%p337) target = $region12
      $region11: #{tpu_custom_call.1} parent=5 // pred_region
        %s341 = ssub.s32 %s26, 1
        // Predicated region
        $region13: #{tpu_custom_call.1} parent=11 // pred_check
          %p342 = pneg %p59
        $region14: #{tpu_custom_call.1} parent=11 // pred_check_branch
          %344 = sbr.rel (%p342) target = $region16
        $region15: #{tpu_custom_call.1} parent=11 // pred_region
          %s346 = ssub.s32 16, 16
          %347 = vsyncadd [#allocation8], %s346
          %350 = dma.hbm_to_smem %s0, 16, [#allocation5], [#allocation8]
        $region16: #{tpu_custom_call.1} parent=11 // pred_fallthru
          _
        // Predicated region
        $region17: #{tpu_custom_call.1} parent=11 // pred_check
          %p351 = pneg %p80
        $region18: #{tpu_custom_call.1} parent=11 // pred_check_branch
          %353 = sbr.rel (%p351) target = $region20
        $region19: #{tpu_custom_call.1} parent=11 // pred_region
          %s355 = ssub.s32 128, 128
          %356 = vsyncadd [#allocation6], %s355
          %s357 = sshll.u32 [#allocation9], 4
          %s358 = int_to_ptr.vmem [resolvable:$true] %s357
          %363 = dma.hbm_to_vmem [thread:$0]  %s1, 128, %s358, [#allocation6], 64, 64, 4
        $region20: #{tpu_custom_call.1} parent=11 // pred_fallthru
          _
        // Predicated region
        $region21: #{tpu_custom_call.1} parent=11 // pred_check
          %p364 = pneg %p285
        $region22: #{tpu_custom_call.1} parent=11 // pred_check_branch
          %366 = sbr.rel (%p364) target = $region24
        $region23: #{tpu_custom_call.1} parent=11 // pred_region
          %s368 = ssub.s32 2048, 2048
          %369 = vsyncadd [#allocation14], %s368
          %s370 = sshll.u32 [#allocation15], 4
          %s371 = int_to_ptr.vmem [resolvable:$true] %s370
          %376 = dma.hbm_to_vmem [thread:$0]  %s9, 2048, %s371, [#allocation14], 128, 128, 8
        $region24: #{tpu_custom_call.1} parent=11 // pred_fallthru
          _
        // Predicated region
        $region25: #{tpu_custom_call.1} parent=11 // pred_check
          %p377 = pneg %p306
        $region26: #{tpu_custom_call.1} parent=11 // pred_check_branch
          %379 = sbr.rel (%p377) target = $region28
        $region27: #{tpu_custom_call.1} parent=11 // pred_region
          _
        $region28: #{tpu_custom_call.1} parent=11 // pred_fallthru
          _
      $region12: #{tpu_custom_call.1} parent=5 // pred_fallthru
        _
      %p380 = scmp.lt.s32.totalorder %s26, 3
      // Predicated region
      $region29: #{tpu_custom_call.1} parent=5 // pred_check
        %p381 = pneg %p380
      $region30: #{tpu_custom_call.1} parent=5 // pred_check_branch
        %383 = sbr.rel (%p381) target = $region32
      $region31: #{tpu_custom_call.1} parent=5 // pred_region
        // Predicated region
        $region33: #{tpu_custom_call.1} parent=31 // pred_check
          %p384 = pneg %p102
        $region34: #{tpu_custom_call.1} parent=31 // pred_check_branch
          %386 = sbr.rel (%p384) target = $region36
        $region35: #{tpu_custom_call.1} parent=31 // pred_region
          %s387 = sand.u32 %s26, 1
          %s388 = scalar_lea.sflag [#allocation11], %s387
          %s389 = sand.u32 %s92, 1
          %s390 = smul.addr %s389, 8
          %s391 = scalar_lea.vmem [#allocation10], %s390
          %s392 = smul.u32 2, %s34
          %s394 = ssub.s32 128, 128
          %395 = vsyncadd %s388, %s394
          %s396 = smul.addr %s33, 2
          %s397 = sadd.s32 %s392, %s396
          %s398 = smul.addr %s397, 64
          %s399 = scalar_lea.hbm %s2, %s398
          %s400 = sshll.u32 %s391, 4
          %s401 = int_to_ptr.vmem [resolvable:$true] %s400
          %406 = dma.hbm_to_vmem [thread:$0]  %s399, 128, %s401, %s388, 64, 64, 4
        $region36: #{tpu_custom_call.1} parent=31 // pred_fallthru
          _
        // Predicated region
        $region37: #{tpu_custom_call.1} parent=31 // pred_check
          %p407 = pneg %p128
        $region38: #{tpu_custom_call.1} parent=31 // pred_check_branch
          %409 = sbr.rel (%p407) target = $region40
        $region39: #{tpu_custom_call.1} parent=31 // pred_region
          %s410 = sand.u32 %s26, 1
          %s411 = scalar_lea.sflag [#allocation11], %s410
          %s412 = sand.u32 %s118, 1
          %s413 = smul.addr %s412, 128
          %s414 = scalar_lea.vmem [#allocation12], %s413
          %s416 = ssub.s32 2048, 2048
          %417 = vsyncadd %s411, %s416
          %s418 = smul.addr %s33, 16
          %s419 = smul.addr %s418, 128
          %s420 = scalar_lea.hbm %s3, %s419
          %s421 = sshll.u32 %s414, 4
          %s422 = int_to_ptr.vmem [resolvable:$true] %s421
          %427 = dma.hbm_to_vmem [thread:$0]  %s420, 2048, %s422, %s411, 128, 128, 8
        $region40: #{tpu_custom_call.1} parent=31 // pred_fallthru
          _
        // Predicated region
        $region41: #{tpu_custom_call.1} parent=31 // pred_check
          %p428 = pneg %p154
        $region42: #{tpu_custom_call.1} parent=31 // pred_check_branch
          %430 = sbr.rel (%p428) target = $region44
        $region43: #{tpu_custom_call.1} parent=31 // pred_region
          %p431 = scmp.lt.s32.totalorder %s33, 2
          %s432 = scalar_select %p431, %s33, 2
          %s433 = scalar_lea.vmem %s4, %s432
        $region44: #{tpu_custom_call.1} parent=31 // pred_fallthru
          _
        // Predicated region
        $region45: #{tpu_custom_call.1} parent=31 // pred_check
          %p434 = pneg %p180
        $region46: #{tpu_custom_call.1} parent=31 // pred_check_branch
          %436 = sbr.rel (%p434) target = $region48
        $region47: #{tpu_custom_call.1} parent=31 // pred_region
          %p437 = scmp.lt.s32.totalorder %s33, 2
          %s438 = scalar_select %p437, %s33, 2
          %s439 = scalar_lea.vmem %s5, %s438
        $region48: #{tpu_custom_call.1} parent=31 // pred_fallthru
          _
        // Predicated region
        $region49: #{tpu_custom_call.1} parent=31 // pred_check
          %p440 = pneg %p206
        $region50: #{tpu_custom_call.1} parent=31 // pred_check_branch
          %442 = sbr.rel (%p440) target = $region52
        $region51: #{tpu_custom_call.1} parent=31 // pred_region
          %p443 = scmp.lt.s32.totalorder %s33, 2
          %s444 = scalar_select %p443, %s33, 2
          %s445 = scalar_lea.vmem %s6, %s444
        $region52: #{tpu_custom_call.1} parent=31 // pred_fallthru
          _
        // Predicated region
        $region53: #{tpu_custom_call.1} parent=31 // pred_check
          %p446 = pneg %p232
        $region54: #{tpu_custom_call.1} parent=31 // pred_check_branch
          %448 = sbr.rel (%p446) target = $region56
        $region55: #{tpu_custom_call.1} parent=31 // pred_region
          %s449 = sand.u32 %s26, 1
          %s450 = scalar_lea.sflag [#allocation14], %s449
          %s451 = sand.u32 %s222, 1
          %s452 = smul.addr %s451, 128
          %s453 = scalar_lea.vmem [#allocation13], %s452
          %s455 = ssub.s32 2048, 2048
          %456 = vsyncadd %s450, %s455
          %s457 = smul.addr %s33, 16
          %s458 = smul.addr %s457, 128
          %s459 = scalar_lea.hbm %s7, %s458
          %s460 = sshll.u32 %s453, 4
          %s461 = int_to_ptr.vmem [resolvable:$true] %s460
          %466 = dma.hbm_to_vmem [thread:$0]  %s459, 2048, %s461, %s450, 128, 128, 8
        $region56: #{tpu_custom_call.1} parent=31 // pred_fallthru
          _
        // Predicated region
        $region57: #{tpu_custom_call.1} parent=31 // pred_check
          %p467 = pneg %p258
        $region58: #{tpu_custom_call.1} parent=31 // pred_check_branch
          %469 = sbr.rel (%p467) target = $region60
        $region59: #{tpu_custom_call.1} parent=31 // pred_region
          %p470 = scmp.lt.s32.totalorder %s33, 2
          %s471 = scalar_select %p470, %s33, 2
          %s472 = scalar_lea.vmem %s8, %s471
        $region60: #{tpu_custom_call.1} parent=31 // pred_fallthru
          _
      $region32: #{tpu_custom_call.1} parent=5 // pred_fallthru
        _
      %p473 = scmp.le.s32.totalorder 1, %s26
      %p474 = scmp.lt.s32.totalorder %s26, 4
      %p475 = pnand %p473, %p474
      %p476 = pneg %p475
      // Predicated region
      $region61: #{tpu_custom_call.1} parent=5 // pred_check
        _
      $region62: #{tpu_custom_call.1} parent=5 // pred_check_branch
        %478 = sbr.rel (%p475) target = $region64
      $region63: #{tpu_custom_call.1} parent=5 // pred_region
        %s479 = ssub.s32 %s26, 1
        // Predicated region
        $region65: #{tpu_custom_call.1} parent=63 // pred_check
          %p480 = pneg %p59
        $region66: #{tpu_custom_call.1} parent=63 // pred_check_branch
          %482 = sbr.rel (%p480) target = $region68
        $region67: #{tpu_custom_call.1} parent=63 // pred_region
          %483 = dma.done [#allocation8], 16
        $region68: #{tpu_custom_call.1} parent=63 // pred_fallthru
          _
        // Predicated region
        $region69: #{tpu_custom_call.1} parent=63 // pred_check
          %p484 = pneg %p80
        $region70: #{tpu_custom_call.1} parent=63 // pred_check_branch
          %486 = sbr.rel (%p484) target = $region72
        $region71: #{tpu_custom_call.1} parent=63 // pred_region
          %487 = dma.done [#allocation6], 128
        $region72: #{tpu_custom_call.1} parent=63 // pred_fallthru
          _
        %s488 = sand.u32 %s31, 1
        %s489 = scalar_lea.sflag [#allocation11], %s488
        %s490 = sand.u32 %s95, 1
        %s491 = smul.addr %s490, 8
        %s492 = scalar_lea.vmem [#allocation10], %s491
        // Predicated region
        $region73: #{tpu_custom_call.1} parent=63 // pred_check
          %p493 = pneg %p108
        $region74: #{tpu_custom_call.1} parent=63 // pred_check_branch
          %495 = sbr.rel (%p493) target = $region76
        $region75: #{tpu_custom_call.1} parent=63 // pred_region
          %496 = dma.done %s489, 128
        $region76: #{tpu_custom_call.1} parent=63 // pred_fallthru
          _
        %s497 = sand.u32 %s31, 1
        %s498 = scalar_lea.sflag [#allocation11], %s497
        %s499 = sand.u32 %s121, 1
        %s500 = smul.addr %s499, 128
        %s501 = scalar_lea.vmem [#allocation12], %s500
        // Predicated region
        $region77: #{tpu_custom_call.1} parent=63 // pred_check
          %p502 = pneg %p134
        $region78: #{tpu_custom_call.1} parent=63 // pred_check_branch
          %504 = sbr.rel (%p502) target = $region80
        $region79: #{tpu_custom_call.1} parent=63 // pred_region
          %505 = dma.done %s498, 2048
        $region80: #{tpu_custom_call.1} parent=63 // pred_fallthru
          _
        %s506 = sand.u32 %s31, 1
        %s507 = scalar_lea.sflag [#allocation14], %s506
        %s508 = sand.u32 %s225, 1
        %s509 = smul.addr %s508, 128
        %s510 = scalar_lea.vmem [#allocation13], %s509
        // Predicated region
        $region81: #{tpu_custom_call.1} parent=63 // pred_check
          %p511 = pneg %p238
        $region82: #{tpu_custom_call.1} parent=63 // pred_check_branch
          %513 = sbr.rel (%p511) target = $region84
        $region83: #{tpu_custom_call.1} parent=63 // pred_region
          %514 = dma.done %s507, 2048
        $region84: #{tpu_custom_call.1} parent=63 // pred_fallthru
          _
        // Predicated region
        $region85: #{tpu_custom_call.1} parent=63 // pred_check
          %p515 = pneg %p285
        $region86: #{tpu_custom_call.1} parent=63 // pred_check_branch
          %517 = sbr.rel (%p515) target = $region88
        $region87: #{tpu_custom_call.1} parent=63 // pred_region
          %518 = dma.done [#allocation14], 2048
        $region88: #{tpu_custom_call.1} parent=63 // pred_fallthru
          _
        %519 = sfence
        %p520 = pneg %p59
        %p521 = pneg %p56
        %p522 = pneg %p80
        %p523 = pneg %p77
        %s524 = sand.u32 %s31, 1
        %s525 = scalar_lea.sflag [#allocation11], %s524
        %s526 = sand.u32 %s95, 1
        %s527 = smul.addr %s526, 8
        %s528 = scalar_lea.vmem [#allocation10], %s527
        %p529 = pneg %p108
        %p530 = pneg %p105
        %s531 = sand.u32 %s31, 1
        %s532 = scalar_lea.sflag [#allocation11], %s531
        %s533 = sand.u32 %s121, 1
        %s534 = smul.addr %s533, 128
        %s535 = scalar_lea.vmem [#allocation12], %s534
        %p536 = pneg %p134
        %p537 = pneg %p131
        %p538 = scmp.lt.s32.totalorder %s35, 2
        %s539 = scalar_select %p538, %s35, 2
        %s540 = scalar_lea.vmem %s4, %s539
        %p541 = pneg %p160
        %p542 = pneg %p157
        %p543 = scmp.lt.s32.totalorder %s35, 2
        %s544 = scalar_select %p543, %s35, 2
        %s545 = scalar_lea.vmem %s5, %s544
        %p546 = pneg %p186
        %p547 = pneg %p183
        %p548 = scmp.lt.s32.totalorder %s35, 2
        %s549 = scalar_select %p548, %s35, 2
        %s550 = scalar_lea.vmem %s6, %s549
        %p551 = pneg %p212
        %p552 = pneg %p209
        %s553 = sand.u32 %s31, 1
        %s554 = scalar_lea.sflag [#allocation14], %s553
        %s555 = sand.u32 %s225, 1
        %s556 = smul.addr %s555, 128
        %s557 = scalar_lea.vmem [#allocation13], %s556
        %p558 = pneg %p238
        %p559 = pneg %p235
        %p560 = scmp.lt.s32.totalorder %s35, 2
        %s561 = scalar_select %p560, %s35, 2
        %s562 = scalar_lea.vmem %s8, %s561
        %p563 = pneg %p264
        %p564 = pneg %p261
        %p565 = pneg %p285
        %p566 = pneg %p282
        %p567 = pneg %p306
        %p568 = pneg %p303
        %p569 = pneg %p327
        %p570 = pneg %p324
        %s571 = smul.u32 2, %s36
        %p572 = scmp.lt.s32.totalorder %s35, 2
        %s573 = scalar_select %p572, %s35, 2
        %s574 = scalar_lea.vmem %s4, %s573
        %p575 = scmp.lt.s32.totalorder %s35, 2
        %s576 = scalar_select %p575, %s35, 2
        %s577 = scalar_lea.vmem %s5, %s576
        %p578 = scmp.lt.s32.totalorder %s35, 2
        %s579 = scalar_select %p578, %s35, 2
        %s580 = scalar_lea.vmem %s6, %s579
        %p581 = scmp.lt.s32.totalorder %s35, 2
        %s582 = scalar_select %p581, %s35, 2
        %s583 = scalar_lea.vmem %s8, %s582
        %p585 = scmp.eq.s32.totalorder %s35, 0
        %p586 = scmp.eq.s32.totalorder %s36, 0
        %p587 = pnand %p585, %p586
        %p588 = pneg %p587
        // Predicated region
        $region89: #{tpu_custom_call.1} parent=63 // pred_check
          _
        $region90: #{tpu_custom_call.1} parent=63 // pred_check_branch
          %590 = sbr.rel (%p587) target = $region92
        $region91: #{tpu_custom_call.1} parent=63 // pred_region
          %v591 = vld [vmem:[#allocation9] sm:$0xf]
          %v592 = vld [vmem:[#allocation9 + $0x4] sm:$0xf]
          %v593 = vunpack.c.l.bf16 %v591
          %v594 = vunpack.c.l.bf16 %v592
          %v595 = vld [vmem:[#allocation15] sm:$0xff]
          %v596 = vld [vmem:[#allocation15 + $0x8] sm:$0xff]
          %v597 = vld [vmem:[#allocation15 + $0x10] sm:$0xff]
          %v598 = vld [vmem:[#allocation15 + $0x18] sm:$0xff]
          %v599 = vld [vmem:[#allocation15 + $0x20] sm:$0xff]
          %v600 = vld [vmem:[#allocation15 + $0x28] sm:$0xff]
          %v601 = vld [vmem:[#allocation15 + $0x30] sm:$0xff]
          %v602 = vld [vmem:[#allocation15 + $0x38] sm:$0xff]
          %v603 = vld [vmem:[#allocation15 + $0x40] sm:$0xff]
          %v604 = vld [vmem:[#allocation15 + $0x48] sm:$0xff]
          %v605 = vld [vmem:[#allocation15 + $0x50] sm:$0xff]
          %v606 = vld [vmem:[#allocation15 + $0x58] sm:$0xff]
          %v607 = vld [vmem:[#allocation15 + $0x60] sm:$0xff]
          %v608 = vld [vmem:[#allocation15 + $0x68] sm:$0xff]
          %v609 = vld [vmem:[#allocation15 + $0x70] sm:$0xff]
          %v610 = vld [vmem:[#allocation15 + $0x78] sm:$0xff]
          %v611 = vld [vmem:[%s10] sm:$0x1]
          %v613 = vlaneseq
          %v614 = vshrl.u32 %v613, 7
          %v615 = vsub.s32 0, %v614
          %v616 = vrot.slane %v611, %v615
          %618 = vmatprep.subr.mxu0 0.0
          %619 = vmatpush1.msra.mxu0 %v610
          %620 = vmatprep.subr.mxu0 0.0
          %621 = vmatpush1.msra.mxu0 %v609
          %622 = vmatprep.subr.mxu0 0.0
          %623 = vmatpush1.msra.mxu0 %v608
          %624 = vmatprep.subr.mxu0 0.0
          %625 = vmatpush1.msra.mxu0 %v607
          %626 = vmatprep.subr.mxu0 0.0
          %627 = vmatpush1.msra.mxu0 %v606
          %628 = vmatprep.subr.mxu0 0.0
          %629 = vmatpush1.msra.mxu0 %v605
          %630 = vmatprep.subr.mxu0 0.0
          %631 = vmatpush1.msra.mxu0 %v604
          %632 = vmatprep.subr.mxu0 0.0
          %633 = vmatpush1.msra.mxu0 %v603
          %634 = vmatprep.subr.mxu0 0.0
          %635 = vmatpush1.msra.mxu0 %v602
          %636 = vmatprep.subr.mxu0 0.0
          %637 = vmatpush1.msra.mxu0 %v601
          %638 = vmatprep.subr.mxu0 0.0
          %639 = vmatpush1.msra.mxu0 %v600
          %640 = vmatprep.subr.mxu0 0.0
          %641 = vmatpush1.msra.mxu0 %v599
          %642 = vmatprep.subr.mxu0 0.0
          %643 = vmatpush1.msra.mxu0 %v598
          %644 = vmatprep.subr.mxu0 0.0
          %645 = vmatpush1.msra.mxu0 %v597
          %646 = vmatprep.subr.mxu0 0.0
          %647 = vmatpush1.msra.mxu0 %v596
          %648 = vmatprep.subr.mxu0 0.0
          %649 = vmatpush1.msra.mxu0 %v595
          %650 = vmatprep.subr.mxu0 0.0
          %651 = vmatpush2.msra.mxu0 0.0
          %652 = vmatprep.subr.mxu0 0.0
          %653 = vmatpush2.msra.mxu0 0.0
          %654 = vmatprep.subr.mxu0 0.0
          %655 = vmatpush2.msra.mxu0 0.0
          %656 = vmatprep.subr.mxu0 0.0
          %657 = vmatpush2.msra.mxu0 0.0
          %658 = vmatprep.subr.mxu0 0.0
          %659 = vmatpush2.msra.mxu0 0.0
          %660 = vmatprep.subr.mxu0 0.0
          %661 = vmatpush2.msra.mxu0 0.0
          %662 = vmatprep.subr.mxu0 0.0
          %663 = vmatpush2.msra.mxu0 0.0
          %664 = vmatprep.subr.mxu0 0.0
          %665 = vmatpush2.msra.mxu0 0.0
          %666 = vmatprep.subr.mxu0 0.0
          %667 = vmatpush2.msra.mxu0 0.0
          %668 = vmatprep.subr.mxu0 0.0
          %669 = vmatpush2.msra.mxu0 0.0
          %670 = vmatprep.subr.mxu0 0.0
          %671 = vmatpush2.msra.mxu0 0.0
          %672 = vmatprep.subr.mxu0 0.0
          %673 = vmatpush2.msra.mxu0 0.0
          %674 = vmatprep.subr.mxu0 0.0
          %675 = vmatpush2.msra.mxu0 0.0
          %676 = vmatprep.subr.mxu0 0.0
          %677 = vmatpush2.msra.mxu0 0.0
          %678 = vmatprep.subr.mxu0 0.0
          %679 = vmatpush2.msra.mxu0 0.0
          %680 = vmatprep.subr.mxu0 0.0
          %681 = vmatpush2.msra.mxu0 0.0
          %682 = vmatprep.mubr.f32.mxu0 0.0
          %683 = vmatmul.mubr.f32.gmra.mxu0 %v593
          %v684 = vpop.f32.mrf.mxu0
          %v685 = vadd.f32 %v616, %v684
          %v686 = vpop.f32.mrf.mxu0
          %687 = vmatprep.mubr.f32.mxu0 0.0
          %688 = vmatmul.mubr.f32.gmra.mxu0 %v594
          %v689 = vpop.f32.mrf.mxu0
          %v690 = vadd.f32 %v616, %v689
          %v691 = vpop.f32.mrf.mxu0
          %692 = vdwg.mxu0
          %693 = vst [vmem:[#allocation16] sm:$0xff] %v685
          %694 = vst [vmem:[#allocation16 + $0x8] sm:$0xff] %v690
        $region92: #{tpu_custom_call.1} parent=63 // pred_fallthru
          _
        // Predicated region
        $region93: #{tpu_custom_call.1} parent=63 // pred_check
          %p695 = pneg %p586
        $region94: #{tpu_custom_call.1} parent=63 // pred_check_branch
          %697 = sbr.rel (%p695) target = $region96
        $region95: #{tpu_custom_call.1} parent=63 // pred_region
          %698 = vst [vmem:[#allocation3] sm:$0x1] 0.0
          %699 = vst [vmem:[#allocation4] sm:$0x1] 0.0
        $region96: #{tpu_custom_call.1} parent=63 // pred_fallthru
          _
        %s700 = sld [smem:[#allocation5 + %s35]]
        %s701 = smul.u32 %s36, 16
        %v702 = vld [vmem:[%s492] sm:$0xf]
        %v703 = vld [vmem:[%s492 + $0x4] sm:$0xf]
        %v704 = vld [vmem:[#allocation9] sm:$0xf]
        %v705 = vld [vmem:[#allocation9 + $0x4] sm:$0xf]
        %v708 = vunpack.c.l.b16 %v702
        %v709 = vunpack.c.l.b16 %v703
        %v710 = vpack.c.b16 %v709, %v708
        %v713 = vunpack.c.l.b16 %v704
        %v714 = vunpack.c.l.b16 %v705
        %v715 = vpack.c.b16 %v714, %v713
        %vm717 = vcmask 130048
        %v719 = vsel %vm717, %v710, 0
        %721 = vmatprep.subr.bf16.mxu0 0
        %722 = vmatpush1.bf16.msra.mxu0 0
        %723 = vmatprep.subr.bf16.mxu0 0
        %724 = vmatpush1.bf16.msra.mxu0 0
        %725 = vmatprep.subr.bf16.mxu0 0
        %726 = vmatpush1.bf16.msra.mxu0 0
        %727 = vmatprep.subr.bf16.mxu0 0
        %728 = vmatpush1.bf16.msra.mxu0 0
        %729 = vmatprep.subr.bf16.mxu0 0
        %730 = vmatpush1.bf16.msra.mxu0 0
        %731 = vmatprep.subr.bf16.mxu0 0
        %732 = vmatpush1.bf16.msra.mxu0 0
        %733 = vmatprep.subr.bf16.mxu0 0
        %734 = vmatpush1.bf16.msra.mxu0 0
        %735 = vmatprep.subr.bf16.mxu0 0
        %736 = vmatpush1.bf16.msra.mxu0 %v715
        %737 = vmatprep.subr.bf16.mxu0 0
        %738 = vmatpush2.bf16.msra.mxu0 0
        %739 = vmatprep.subr.bf16.mxu0 0
        %740 = vmatpush2.bf16.msra.mxu0 0
        %741 = vmatprep.subr.bf16.mxu0 0
        %742 = vmatpush2.bf16.msra.mxu0 0
        %743 = vmatprep.subr.bf16.mxu0 0
        %744 = vmatpush2.bf16.msra.mxu0 0
        %745 = vmatprep.subr.bf16.mxu0 0
        %746 = vmatpush2.bf16.msra.mxu0 0
        %747 = vmatprep.subr.bf16.mxu0 0
        %748 = vmatpush2.bf16.msra.mxu0 0
        %749 = vmatprep.subr.bf16.mxu0 0
        %750 = vmatpush2.bf16.msra.mxu0 0
        %751 = vmatprep.subr.bf16.mxu0 0
        %752 = vmatpush2.bf16.msra.mxu0 0
        %753 = vmatprep.mubr.bf16.mxu0 0
        %754 = vmatmul.mubr.bf16.gmra.mxu0 %v719
        %v755 = vpop.f32.mrf.mxu0
        %v756 = vadd.f32 0.0, %v755
        %v757 = vpop.f32.mrf.mxu0
        %v758 = vpop.f32.mrf.mxu0
        %v759 = vadd.f32 0.0, %v758
        %v760 = vpop.f32.mrf.mxu0
        %761 = vdwg.mxu0
        %s762 = sshra.s32 %s701, 3
        %s763 = sand.u32 %s701, 7
        %s764 = smul.addr %s762, 4
        %s765 = scalar_lea.vmem [#allocation9], %s764
        %v766 = vld [vmem:[%s765] sm:$0xf]
        %v767 = vld [vmem:[%s765 + $0x4] sm:$0xf]
        %v768 = vunpack.c.l.bf16 %v766
        %v769 = vunpack.c.l.bf16 %v767
        %s770 = sadd.f32 %s700, 1.0
        %v771 = vstv %s770
        %v772 = vmul.f32 %v771, %v768
        %v773 = vmul.f32 %v771, %v769
        %v774 = vadd.f32 %v772, %v756
        %v775 = vadd.f32 %v773, %v759
        %v776 = vld [vmem:[%s501] sm:$0xff]
        %v777 = vld [vmem:[%s501 + $0x8] sm:$0xff]
        %v778 = vld [vmem:[%s501 + $0x10] sm:$0xff]
        %v779 = vld [vmem:[%s501 + $0x18] sm:$0xff]
        %v780 = vld [vmem:[%s501 + $0x20] sm:$0xff]
        %v781 = vld [vmem:[%s501 + $0x28] sm:$0xff]
        %v782 = vld [vmem:[%s501 + $0x30] sm:$0xff]
        %v783 = vld [vmem:[%s501 + $0x38] sm:$0xff]
        %v784 = vld [vmem:[%s501 + $0x40] sm:$0xff]
        %v785 = vld [vmem:[%s501 + $0x48] sm:$0xff]
        %v786 = vld [vmem:[%s501 + $0x50] sm:$0xff]
        %v787 = vld [vmem:[%s501 + $0x58] sm:$0xff]
        %v788 = vld [vmem:[%s501 + $0x60] sm:$0xff]
        %v789 = vld [vmem:[%s501 + $0x68] sm:$0xff]
        %v790 = vld [vmem:[%s501 + $0x70] sm:$0xff]
        %v791 = vld [vmem:[%s501 + $0x78] sm:$0xff]
        %v792 = vld [vmem:[%s574] sm:$0x1]
        %v794 = vlaneseq
        %v795 = vshrl.u32 %v794, 7
        %v796 = vsub.s32 0, %v795
        %v797 = vrot.slane %v792, %v796
        %799 = vmatprep.subr.mxu0 0.0
        %800 = vmatpush1.msra.mxu0 %v791
        %801 = vmatprep.subr.mxu0 0.0
        %802 = vmatpush1.msra.mxu0 %v790
        %803 = vmatprep.subr.mxu0 0.0
        %804 = vmatpush1.msra.mxu0 %v789
        %805 = vmatprep.subr.mxu0 0.0
        %806 = vmatpush1.msra.mxu0 %v788
        %807 = vmatprep.subr.mxu0 0.0
        %808 = vmatpush1.msra.mxu0 %v787
        %809 = vmatprep.subr.mxu0 0.0
        %810 = vmatpush1.msra.mxu0 %v786
        %811 = vmatprep.subr.mxu0 0.0
        %812 = vmatpush1.msra.mxu0 %v785
        %813 = vmatprep.subr.mxu0 0.0
        %814 = vmatpush1.msra.mxu0 %v784
        %815 = vmatprep.subr.mxu0 0.0
        %816 = vmatpush1.msra.mxu0 %v783
        %817 = vmatprep.subr.mxu0 0.0
        %818 = vmatpush1.msra.mxu0 %v782
        %819 = vmatprep.subr.mxu0 0.0
        %820 = vmatpush1.msra.mxu0 %v781
        %821 = vmatprep.subr.mxu0 0.0
        %822 = vmatpush1.msra.mxu0 %v780
        %823 = vmatprep.subr.mxu0 0.0
        %824 = vmatpush1.msra.mxu0 %v779
        %825 = vmatprep.subr.mxu0 0.0
        %826 = vmatpush1.msra.mxu0 %v778
        %827 = vmatprep.subr.mxu0 0.0
        %828 = vmatpush1.msra.mxu0 %v777
        %829 = vmatprep.subr.mxu0 0.0
        %830 = vmatpush1.msra.mxu0 %v776
        %831 = vmatprep.subr.mxu0 0.0
        %832 = vmatpush2.msra.mxu0 0.0
        %833 = vmatprep.subr.mxu0 0.0
        %834 = vmatpush2.msra.mxu0 0.0
        %835 = vmatprep.subr.mxu0 0.0
        %836 = vmatpush2.msra.mxu0 0.0
        %837 = vmatprep.subr.mxu0 0.0
        %838 = vmatpush2.msra.mxu0 0.0
        %839 = vmatprep.subr.mxu0 0.0
        %840 = vmatpush2.msra.mxu0 0.0
        %841 = vmatprep.subr.mxu0 0.0
        %842 = vmatpush2.msra.mxu0 0.0
        %843 = vmatprep.subr.mxu0 0.0
        %844 = vmatpush2.msra.mxu0 0.0
        %845 = vmatprep.subr.mxu0 0.0
        %846 = vmatpush2.msra.mxu0 0.0
        %847 = vmatprep.subr.mxu0 0.0
        %848 = vmatpush2.msra.mxu0 0.0
        %849 = vmatprep.subr.mxu0 0.0
        %850 = vmatpush2.msra.mxu0 0.0
        %851 = vmatprep.subr.mxu0 0.0
        %852 = vmatpush2.msra.mxu0 0.0
        %853 = vmatprep.subr.mxu0 0.0
        %854 = vmatpush2.msra.mxu0 0.0
        %855 = vmatprep.subr.mxu0 0.0
        %856 = vmatpush2.msra.mxu0 0.0
        %857 = vmatprep.subr.mxu0 0.0
        %858 = vmatpush2.msra.mxu0 0.0
        %859 = vmatprep.subr.mxu0 0.0
        %860 = vmatpush2.msra.mxu0 0.0
        %861 = vmatprep.subr.mxu0 0.0
        %862 = vmatpush2.msra.mxu0 0.0
        %863 = vmatprep.mubr.f32.mxu0 0.0
        %864 = vmatmul.mubr.f32.gmra.mxu0 %v774
        %v865 = vpop.f32.mrf.mxu0
        %v866 = vadd.f32 %v797, %v865
        %v867 = vpop.f32.mrf.mxu0
        %868 = vmatprep.mubr.f32.mxu0 0.0
        %869 = vmatmul.mubr.f32.gmra.mxu0 %v775
        %v870 = vpop.f32.mrf.mxu0
        %v871 = vadd.f32 %v797, %v870
        %v872 = vpop.f32.mrf.mxu0
        %873 = vdwg.mxu0
        %v874 = vlaneseq
        %v875 = vshrl.u32 %v874, 7
        %v876 = vadd.s32 %v875, 8
        %v877 = vstv %s701
        %v878 = vadd.s32 %v875, %v877
        %v879 = vadd.s32 %v876, %v877
        %vm880 = vcmp.lt.s32.totalorder %v878, 16
        %vm881 = vcmp.lt.s32.totalorder %v879, 16
        %v882 = vsel %vm880, 1, 0
        %v883 = vsel %vm881, 1, 0
        %vm884 = vcmp.eq.s32.totalorder %v882, 1
        %vm885 = vcmp.eq.s32.totalorder %v883, 1
        %v886 = vsel %vm884, %v866, 0.0
        %v887 = vsel %vm885, %v871, 0.0
        %v888 = vld [vmem:[#allocation3] sm:$0x1]
        %v889 = vadd.f32 %v886, %v887
        %v890 = vrot.slane %v889, 4
        %v891 = vadd.f32 %v889, %v890
        %v892 = vrot.slane %v891, 2
        %v893 = vadd.f32 %v891, %v892
        %v894 = vrot.slane %v893, 1
        %v895 = vadd.f32 %v893, %v894
        %v896 = vadd.f32 %v888, %v895
        %897 = vst [vmem:[#allocation3] sm:$0x1] %v896
        %v898 = vld [vmem:[#allocation4] sm:$0x1]
        %v899 = vmul.f32 %v886, %v886
        %v900 = vmul.f32 %v887, %v887
        %v901 = vadd.f32 %v899, %v900
        %v902 = vrot.slane %v901, 4
        %v903 = vadd.f32 %v901, %v902
        %v904 = vrot.slane %v903, 2
        %v905 = vadd.f32 %v903, %v904
        %v906 = vrot.slane %v905, 1
        %v907 = vadd.f32 %v905, %v906
        %v908 = vadd.f32 %v898, %v907
        %909 = vst [vmem:[#allocation4] sm:$0x1] %v908
        %s910 = scalar_lea.vmem [#allocation2], %s701
        %911 = vst [vmem:[%s910] sm:$0xff] %v866
        %912 = vst [vmem:[%s910 + $0x8] sm:$0xff] %v871
        // Predicated region
        $region97: #{tpu_custom_call.1} parent=63 // pred_check
          %p913 = pneg %p586
        $region98: #{tpu_custom_call.1} parent=63 // pred_check_branch
          %915 = sbr.rel (%p913) target = $region100
        $region99: #{tpu_custom_call.1} parent=63 // pred_region
          %v916 = vld [vmem:[#allocation3] sm:$0x1]
          %v917 = vmul.f32 %v916, 0.0625
          %v918 = vld [vmem:[#allocation4] sm:$0x1]
          %v919 = vmul.f32 %v918, 0.0625
          %v920 = vmul.f32 %v917, %v917
          %v921 = vsub.f32 %v919, %v920
          %v922 = vadd.f32 %v921, 1e-05
          %v923 = vrsqrt.pop %v922
          %v924 = vld [vmem:[#allocation2] sm:$0xff]
          %v925 = vld [vmem:[#allocation2 + $0x8] sm:$0xff]
          %v927 = vlaneseq
          %v928 = vshrl.u32 %v927, 7
          %v929 = vsub.s32 0, %v928
          %v930 = vrot.slane %v917, %v929
          %v932 = vsub.f32 %v924, %v930
          %v933 = vsub.f32 %v925, %v930
          %v935 = vlaneseq
          %v936 = vshrl.u32 %v935, 7
          %v937 = vsub.s32 0, %v936
          %v938 = vrot.slane %v923, %v937
          %v940 = vmul.f32 %v932, %v938
          %v941 = vmul.f32 %v933, %v938
          %v942 = vld [vmem:[%s577] sm:$0x1]
          %v944 = vlaneseq
          %v945 = vshrl.u32 %v944, 7
          %v946 = vsub.s32 0, %v945
          %v947 = vrot.slane %v942, %v946
          %v949 = vmul.f32 %v940, %v947
          %v950 = vmul.f32 %v941, %v947
          %v951 = vld [vmem:[%s580] sm:$0x1]
          %v953 = vlaneseq
          %v954 = vshrl.u32 %v953, 7
          %v955 = vsub.s32 0, %v954
          %v956 = vrot.slane %v951, %v955
          %v958 = vadd.f32 %v949, %v956
          %v959 = vadd.f32 %v950, %v956
          %v960 = vmax.f32 %v958, 0.0
          %v961 = vmax.f32 %v959, 0.0
          %v962 = vld [vmem:[%s510] sm:$0xff]
          %v963 = vld [vmem:[%s510 + $0x8] sm:$0xff]
          %v964 = vld [vmem:[%s510 + $0x10] sm:$0xff]
          %v965 = vld [vmem:[%s510 + $0x18] sm:$0xff]
          %v966 = vld [vmem:[%s510 + $0x20] sm:$0xff]
          %v967 = vld [vmem:[%s510 + $0x28] sm:$0xff]
          %v968 = vld [vmem:[%s510 + $0x30] sm:$0xff]
          %v969 = vld [vmem:[%s510 + $0x38] sm:$0xff]
          %v970 = vld [vmem:[%s510 + $0x40] sm:$0xff]
          %v971 = vld [vmem:[%s510 + $0x48] sm:$0xff]
          %v972 = vld [vmem:[%s510 + $0x50] sm:$0xff]
          %v973 = vld [vmem:[%s510 + $0x58] sm:$0xff]
          %v974 = vld [vmem:[%s510 + $0x60] sm:$0xff]
          %v975 = vld [vmem:[%s510 + $0x68] sm:$0xff]
          %v976 = vld [vmem:[%s510 + $0x70] sm:$0xff]
          %v977 = vld [vmem:[%s510 + $0x78] sm:$0xff]
          %v978 = vld [vmem:[%s583] sm:$0x1]
          %v980 = vlaneseq
          %v981 = vshrl.u32 %v980, 7
          %v982 = vsub.s32 0, %v981
          %v983 = vrot.slane %v978, %v982
          %985 = vmatprep.subr.mxu0 0.0
          %986 = vmatpush1.msra.mxu0 %v977
          %987 = vmatprep.subr.mxu0 0.0
          %988 = vmatpush1.msra.mxu0 %v976
          %989 = vmatprep.subr.mxu0 0.0
          %990 = vmatpush1.msra.mxu0 %v975
          %991 = vmatprep.subr.mxu0 0.0
          %992 = vmatpush1.msra.mxu0 %v974
          %993 = vmatprep.subr.mxu0 0.0
          %994 = vmatpush1.msra.mxu0 %v973
          %995 = vmatprep.subr.mxu0 0.0
          %996 = vmatpush1.msra.mxu0 %v972
          %997 = vmatprep.subr.mxu0 0.0
          %998 = vmatpush1.msra.mxu0 %v971
          %999 = vmatprep.subr.mxu0 0.0
          %1000 = vmatpush1.msra.mxu0 %v970
          %1001 = vmatprep.subr.mxu0 0.0
          %1002 = vmatpush1.msra.mxu0 %v969
          %1003 = vmatprep.subr.mxu0 0.0
          %1004 = vmatpush1.msra.mxu0 %v968
          %1005 = vmatprep.subr.mxu0 0.0
          %1006 = vmatpush1.msra.mxu0 %v967
          %1007 = vmatprep.subr.mxu0 0.0
          %1008 = vmatpush1.msra.mxu0 %v966
          %1009 = vmatprep.subr.mxu0 0.0
          %1010 = vmatpush1.msra.mxu0 %v965
          %1011 = vmatprep.subr.mxu0 0.0
          %1012 = vmatpush1.msra.mxu0 %v964
          %1013 = vmatprep.subr.mxu0 0.0
          %1014 = vmatpush1.msra.mxu0 %v963
          %1015 = vmatprep.subr.mxu0 0.0
          %1016 = vmatpush1.msra.mxu0 %v962
          %1017 = vmatprep.subr.mxu0 0.0
          %1018 = vmatpush2.msra.mxu0 0.0
          %1019 = vmatprep.subr.mxu0 0.0
          %1020 = vmatpush2.msra.mxu0 0.0
          %1021 = vmatprep.subr.mxu0 0.0
          %1022 = vmatpush2.msra.mxu0 0.0
          %1023 = vmatprep.subr.mxu0 0.0
          %1024 = vmatpush2.msra.mxu0 0.0
          %1025 = vmatprep.subr.mxu0 0.0
          %1026 = vmatpush2.msra.mxu0 0.0
          %1027 = vmatprep.subr.mxu0 0.0
          %1028 = vmatpush2.msra.mxu0 0.0
          %1029 = vmatprep.subr.mxu0 0.0
          %1030 = vmatpush2.msra.mxu0 0.0
          %1031 = vmatprep.subr.mxu0 0.0
          %1032 = vmatpush2.msra.mxu0 0.0
          %1033 = vmatprep.subr.mxu0 0.0
          %1034 = vmatpush2.msra.mxu0 0.0
          %1035 = vmatprep.subr.mxu0 0.0
          %1036 = vmatpush2.msra.mxu0 0.0
          %1037 = vmatprep.subr.mxu0 0.0
          %1038 = vmatpush2.msra.mxu0 0.0
          %1039 = vmatprep.subr.mxu0 0.0
          %1040 = vmatpush2.msra.mxu0 0.0
          %1041 = vmatprep.subr.mxu0 0.0
          %1042 = vmatpush2.msra.mxu0 0.0
          %1043 = vmatprep.subr.mxu0 0.0
          %1044 = vmatpush2.msra.mxu0 0.0
          %1045 = vmatprep.subr.mxu0 0.0
          %1046 = vmatpush2.msra.mxu0 0.0
          %1047 = vmatprep.subr.mxu0 0.0
          %1048 = vmatpush2.msra.mxu0 0.0
          %1049 = vmatprep.mubr.f32.mxu0 0.0
          %1050 = vmatmul.mubr.f32.gmra.mxu0 %v960
          %v1051 = vpop.f32.mrf.mxu0
          %v1052 = vadd.f32 %v983, %v1051
          %v1053 = vpop.f32.mrf.mxu0
          %1054 = vmatprep.mubr.f32.mxu0 0.0
          %1055 = vmatmul.mubr.f32.gmra.mxu0 %v961
          %v1056 = vpop.f32.mrf.mxu0
          %v1057 = vadd.f32 %v983, %v1056
          %v1058 = vpop.f32.mrf.mxu0
          %1059 = vdwg.mxu0
          %v1060 = vld [vmem:[#allocation16] sm:$0xff]
          %v1061 = vld [vmem:[#allocation16 + $0x8] sm:$0xff]
          %v1062 = vadd.f32 %v1060, %v1052
          %v1063 = vadd.f32 %v1061, %v1057
          %1064 = vst [vmem:[#allocation16] sm:$0xff] %v1062
          %1065 = vst [vmem:[#allocation16 + $0x8] sm:$0xff] %v1063
        $region100: #{tpu_custom_call.1} parent=63 // pred_fallthru
          _
        // Predicated region
        $region101: #{tpu_custom_call.1} parent=63 // pred_check
          %p1066 = pneg %p324
        $region102: #{tpu_custom_call.1} parent=63 // pred_check_branch
          %1068 = sbr.rel (%p1066) target = $region104
        $region103: #{tpu_custom_call.1} parent=63 // pred_region
          %s1070 = ssub.s32 256, 256
          %1071 = vsyncadd [#allocation7], %s1070
          %s1072 = sshll.u32 [#allocation16], 4
          %s1073 = int_to_ptr.vmem [resolvable:$true] %s1072
          %1078 = dma.vmem_to_hbm [thread:$0]  %s1073, 256, %s11, [#allocation7], 128, 128, 8
        $region104: #{tpu_custom_call.1} parent=63 // pred_fallthru
          _
        // Predicated region
        $region105: #{tpu_custom_call.1} parent=63 // pred_check
          %p1079 = pneg %p324
        $region106: #{tpu_custom_call.1} parent=63 // pred_check_branch
          %1081 = sbr.rel (%p1079) target = $region108
        $region107: #{tpu_custom_call.1} parent=63 // pred_region
          %1082 = dma.done [#allocation7], 256
        $region108: #{tpu_custom_call.1} parent=63 // pred_fallthru
          _
      $region64: #{tpu_custom_call.1} parent=5 // pred_fallthru
        _
      %p1083 = scmp.le.s32.totalorder 2, %s26
      // Predicated region
      $region109: #{tpu_custom_call.1} parent=5 // pred_check
        %p1084 = pneg %p1083
      $region110: #{tpu_custom_call.1} parent=5 // pred_check_branch
        %1086 = sbr.rel (%p1084) target = $region112
      $region111: #{tpu_custom_call.1} parent=5 // pred_region
        %s1087 = ssub.s32 %s26, 2
      $region112: #{tpu_custom_call.1} parent=5 // pred_fallthru
        _
    $region6: #{tpu_custom_call.1} parent=1 // loop_footer
      %s30 = sadd.s32 1, %s26
    $region7: #{tpu_custom_call.1} parent=1 // loop_footer_branch
      %25 = sbr.rel target = $region3
    $region8: #{tpu_custom_call.1} parent=1 // loop_exit
      _
    %1088 = vsyncpa [#allocation6], 1
    %s1089 = scalar_lea.sflag [#allocation6], 1
    %1090 = vsyncpa %s1089, 1
    %1091 = vsyncpa [#allocation11], 1
    %s1092 = scalar_lea.sflag [#allocation11], 1
    %1093 = vsyncpa %s1092, 1
    %1094 = vsyncpa [#allocation14], 1
    %s1095 = scalar_lea.sflag [#allocation14], 1
    %1096 = vsyncpa %s1095, 1
    %1097 = vsyncpa [#allocation7], 1
    %s1098 = scalar_lea.sflag [#allocation7], 1
    %1099 = vsyncpa %s1098, 1
    %1100 = vsyncpa [#allocation8], 1
    %s1101 = scalar_lea.sflag [#allocation8], 1
    %1102 = vsyncpa %s1101, 1

</llo_original>
